<compile_context>
chip_gen: v6e
topology: v6e:2x2x1
jax: 0.10.0
libtpu: 0.0.40
codegen_flags: <defaults>
</compile_context>

<pallas_src>
import jax
import jax.numpy as jnp
from jax.experimental import pallas as pl
from jax.experimental.pallas import tpu as pltpu


# Logical / padded layer sizes.
D_IN = 813
H1, H2 = 512, 256
H3, H3_P = 32, 128          # layer-3 output padded to 128 lanes (zero columns)
D_OUT = 1


def critic_kernel(x_ref,
                  w1_ref, b1_ref,
                  w2_ref, b2_ref,
                  w3_ref, b3_ref,
                  w4_ref, b4_ref,
                  out_ref):
    # x tile: (TB, 813) fp32 -> bf16 in-kernel (no separate XLA pad/cast pass).
    x = x_ref[...].astype(jnp.bfloat16)
    h = jnp.dot(x, w1_ref[...], preferred_element_type=jnp.float32) + b1_ref[...]
    h = jnp.maximum(h, 0.0).astype(jnp.bfloat16)
    h = jnp.dot(h, w2_ref[...], preferred_element_type=jnp.float32) + b2_ref[...]
    h = jnp.maximum(h, 0.0).astype(jnp.bfloat16)
    h = jnp.dot(h, w3_ref[...], preferred_element_type=jnp.float32) + b3_ref[...]
    h = jnp.maximum(h, 0.0)                      # (TB, 128) fp32; columns 32: are exactly 0
    # Layer 4 on the VPU/XLU: fp32 broadcast-multiply by the zero-padded w4 row and
    # lane-reduce to (TB, 1), then add the scalar bias.  Frees the MXU and keeps the
    # output store narrow and fp32-exact for the last layer.
    v = jnp.sum(h * w4_ref[...], axis=-1, keepdims=True) + b4_ref[...]
    out_ref[...] = v.astype(out_ref.dtype)


def _cdiv(a, b):
    return -(-a // b)


def _round_up(n, m):
    return _cdiv(n, m) * m


def pack_params(params):
    """Cast / pad PyTorch-style params ((in,out) weights, (out,) biases) once."""
    (w1, b1), (w2, b2), (w3, b3), (w4, b4) = params
    w1p = w1.astype(jnp.bfloat16)                                     # (813, 512)
    w2p = w2.astype(jnp.bfloat16)                                     # (512, 256)
    w3p = jnp.zeros((H2, H3_P), jnp.bfloat16).at[:, :H3].set(w3.astype(jnp.bfloat16))
    w4p = jnp.zeros((1, H3_P), jnp.float32).at[0, :H3].set(w4.reshape(H3).astype(jnp.float32))
    b1p = b1.reshape(1, H1).astype(jnp.float32)
    b2p = b2.reshape(1, H2).astype(jnp.float32)
    b3p = jnp.zeros((1, H3_P), jnp.float32).at[:, :H3].set(b3.reshape(1, H3).astype(jnp.float32))
    b4p = b4.reshape(1, D_OUT).astype(jnp.float32)                    # (1, 1)
    return (w1p, b1p, w2p, b2p, w3p, b3p, w4p, b4p)


def critic_forward(x, packed, *, block_b=512):
    w1p, b1p, w2p, b2p, w3p, b3p, w4p, b4p = packed
    B = x.shape[0]

    # Batch tile selection:
    #   * >= 2 grid steps whenever B allows (even count), so "parallel" shards across
    #     both v7x TensorCores,
    #   * tiles capped at block_b (VMEM) and sublane-aligned (multiple of 8),
    #   * only the LAST block may be a ragged edge ((n-1)*tb < B always), so padded
    #     rows are never written back and padding waste is bounded by one tile.
    n = max(2, _cdiv(B, block_b))
    n = n + (n & 1)                        # even step count balances the two v7x cores
    tb = _round_up(_cdiv(B, n), 8)
    n = _cdiv(B, tb)                       # actual step count (may drop to 1 for tiny B)

    def resident(shape):
        # Constant block index every grid step -> stays resident in VMEM.
        return pl.BlockSpec(shape, lambda i: (0, 0))

    out = pl.pallas_call(
        critic_kernel,
        out_shape=jax.ShapeDtypeStruct((B, D_OUT), jnp.float32),
        grid=(n,),
        in_specs=[
            pl.BlockSpec((tb, D_IN), lambda i: (i, 0)),     # x streamed over batch, fp32, unpadded
            resident((D_IN, H1)),  resident((1, H1)),
            resident((H1, H2)),    resident((1, H2)),
            resident((H2, H3_P)),  resident((1, H3_P)),
            resident((1, H3_P)),   resident((1, D_OUT)),
        ],
        out_specs=pl.BlockSpec((tb, D_OUT), lambda i: (i, 0)),
        compiler_params=pltpu.CompilerParams(
            dimension_semantics=("parallel",)),
    )(x, w1p, b1p, w2p, b2p, w3p, b3p, w4p, b4p)

    return out


def init_linear(key, fan_in, fan_out):
    # Deterministic init mimicking PyTorch's default uniform(-1/sqrt(fan_in), 1/sqrt(fan_in)).
    kw, kb = jax.random.split(key)
    bound = 1.0 / jnp.sqrt(jnp.float32(fan_in))
    w = jax.random.uniform(kw, (fan_in, fan_out), jnp.float32, -bound, bound)
    b = jax.random.uniform(kb, (fan_out,), jnp.float32, -bound, bound)
    return w, b


def reference_forward(x, params):
    # Plain-JAX reference that emulates the kernel's bf16 quantization exactly:
    # bf16 inputs/weights with fp32 accumulation for layers 1-3, fp32 layer 4.
    (w1, b1), (w2, b2), (w3, b3), (w4, b4) = params
    bf = lambda a: a.astype(jnp.bfloat16)
    h = jnp.dot(bf(x), bf(w1), preferred_element_type=jnp.float32) + b1[None, :]
    h = jnp.maximum(h, 0.0)
    h = jnp.dot(bf(h), bf(w2), preferred_element_type=jnp.float32) + b2[None, :]
    h = jnp.maximum(h, 0.0)
    h = jnp.dot(bf(h), bf(w3), preferred_element_type=jnp.float32) + b3[None, :]
    h = jnp.maximum(h, 0.0)
    return jnp.dot(h, w4, preferred_element_type=jnp.float32) + b4[None, :]


if __name__ == "__main__":
    key = jax.random.PRNGKey(0)
    k_x, k1, k2, k3, k4 = jax.random.split(key, 5)

    batch = 16
    x = jax.random.normal(k_x, (batch, D_IN), jnp.float32)

    params = [
        init_linear(k1, D_IN, H1),
        init_linear(k2, H1, H2),
        init_linear(k3, H2, H3),
        init_linear(k4, H3, D_OUT),
    ]
    packed = pack_params(params)

    out = jax.block_until_ready(critic_forward(x, packed))
    ref = reference_forward(x, params)

    assert out.shape == (batch, D_OUT)
    assert jnp.allclose(out, ref, atol=5e-3, rtol=5e-3), "mismatch vs JAX reference"

    print("KERNEL_OK")
</pallas_src>

<mosaic_0001>
module attributes {stable_mosaic.version = 11 : i64} {
  func.func @critic_kernel(%arg0: i32, %arg1: memref<8x813xf32, #tpu.memory_space<vmem>>, %arg2: memref<813x512xbf16, #tpu.memory_space<vmem>>, %arg3: memref<1x512xf32, #tpu.memory_space<vmem>>, %arg4: memref<512x256xbf16, #tpu.memory_space<vmem>>, %arg5: memref<1x256xf32, #tpu.memory_space<vmem>>, %arg6: memref<256x128xbf16, #tpu.memory_space<vmem>>, %arg7: memref<1x128xf32, #tpu.memory_space<vmem>>, %arg8: memref<1x128xf32, #tpu.memory_space<vmem>>, %arg9: memref<1x1xf32, #tpu.memory_space<vmem>>, %arg10: memref<8x1xf32, #tpu.memory_space<vmem>>) attributes {dimension_semantics = [#tpu.dimension_semantics<parallel>], iteration_bounds = array<i64: 2>, scalar_prefetch = 0 : i64, scratch_operands = 0 : i64, tpu.core_type = #tpu.core_type<tc>, window_params = [{transform_indices = @transform_0, window_bounds = array<i64: 8, 813>}, {pipeline_mode = #tpu.pipeline_mode<synchronous>, transform_indices = @transform_1, window_bounds = array<i64: 813, 512>}, {pipeline_mode = #tpu.pipeline_mode<synchronous>, transform_indices = @transform_2, window_bounds = array<i64: 1, 512>}, {pipeline_mode = #tpu.pipeline_mode<synchronous>, transform_indices = @transform_3, window_bounds = array<i64: 512, 256>}, {pipeline_mode = #tpu.pipeline_mode<synchronous>, transform_indices = @transform_4, window_bounds = array<i64: 1, 256>}, {pipeline_mode = #tpu.pipeline_mode<synchronous>, transform_indices = @transform_5, window_bounds = array<i64: 256, 128>}, {pipeline_mode = #tpu.pipeline_mode<synchronous>, transform_indices = @transform_6, window_bounds = array<i64: 1, 128>}, {pipeline_mode = #tpu.pipeline_mode<synchronous>, transform_indices = @transform_7, window_bounds = array<i64: 1, 128>}, {pipeline_mode = #tpu.pipeline_mode<synchronous>, transform_indices = @transform_8, window_bounds = array<i64: 1, 1>}, {transform_indices = @transform_9, window_bounds = array<i64: 8, 1>}]} {
    %c0 = arith.constant 0 : index
    %c0_0 = arith.constant 0 : index
    %0 = vector.load %arg1[%c0, %c0_0] : memref<8x813xf32, #tpu.memory_space<vmem>>, vector<8x813xf32>
    %1 = arith.truncf %0 : vector<8x813xf32> to vector<8x813xbf16>
    %c0_1 = arith.constant 0 : index
    %c0_2 = arith.constant 0 : index
    %2 = vector.load %arg2[%c0_1, %c0_2] : memref<813x512xbf16, #tpu.memory_space<vmem>>, vector<813x512xbf16>
    %cst = arith.constant dense<0.000000e+00> : vector<8x512xf32>
    %3 = tpu.matmul %1, %2, %cst {dimension_numbers = #tpu.dot_dimension_numbers<[1], [0], [0], [1], [0, 0, 1, 1], [], []>} : vector<8x813xbf16>, vector<813x512xbf16>, vector<8x512xf32> -> vector<8x512xf32>
    %c0_3 = arith.constant 0 : index
    %c0_4 = arith.constant 0 : index
    %4 = vector.load %arg3[%c0_3, %c0_4] : memref<1x512xf32, #tpu.memory_space<vmem>>, vector<1x512xf32>
    %5 = vector.broadcast %4 : vector<1x512xf32> to vector<8x512xf32>
    %6 = arith.addf %3, %5 : vector<8x512xf32>
    %cst_5 = arith.constant 0.000000e+00 : f32
    %7 = vector.broadcast %cst_5 : f32 to vector<8x512xf32>
    %8 = arith.maximumf %6, %7 : vector<8x512xf32>
    %9 = arith.truncf %8 : vector<8x512xf32> to vector<8x512xbf16>
    %c0_6 = arith.constant 0 : index
    %c0_7 = arith.constant 0 : index
    %10 = vector.load %arg4[%c0_6, %c0_7] : memref<512x256xbf16, #tpu.memory_space<vmem>>, vector<512x256xbf16>
    %cst_8 = arith.constant dense<0.000000e+00> : vector<8x256xf32>
    %11 = tpu.matmul %9, %10, %cst_8 {dimension_numbers = #tpu.dot_dimension_numbers<[1], [0], [0], [1], [0, 0, 1, 1], [], []>} : vector<8x512xbf16>, vector<512x256xbf16>, vector<8x256xf32> -> vector<8x256xf32>
    %c0_9 = arith.constant 0 : index
    %c0_10 = arith.constant 0 : index
    %12 = vector.load %arg5[%c0_9, %c0_10] : memref<1x256xf32, #tpu.memory_space<vmem>>, vector<1x256xf32>
    %13 = vector.broadcast %12 : vector<1x256xf32> to vector<8x256xf32>
    %14 = arith.addf %11, %13 : vector<8x256xf32>
    %cst_11 = arith.constant 0.000000e+00 : f32
    %15 = vector.broadcast %cst_11 : f32 to vector<8x256xf32>
    %16 = arith.maximumf %14, %15 : vector<8x256xf32>
    %17 = arith.truncf %16 : vector<8x256xf32> to vector<8x256xbf16>
    %c0_12 = arith.constant 0 : index
    %c0_13 = arith.constant 0 : index
    %18 = vector.load %arg6[%c0_12, %c0_13] : memref<256x128xbf16, #tpu.memory_space<vmem>>, vector<256x128xbf16>
    %cst_14 = arith.constant dense<0.000000e+00> : vector<8x128xf32>
    %19 = tpu.matmul %17, %18, %cst_14 {dimension_numbers = #tpu.dot_dimension_numbers<[1], [0], [0], [1], [0, 0, 1, 1], [], []>} : vector<8x256xbf16>, vector<256x128xbf16>, vector<8x128xf32> -> vector<8x128xf32>
    %c0_15 = arith.constant 0 : index
    %c0_16 = arith.constant 0 : index
    %20 = vector.load %arg7[%c0_15, %c0_16] : memref<1x128xf32, #tpu.memory_space<vmem>>, vector<1x128xf32>
    %21 = vector.broadcast %20 : vector<1x128xf32> to vector<8x128xf32>
    %22 = arith.addf %19, %21 : vector<8x128xf32>
    %cst_17 = arith.constant 0.000000e+00 : f32
    %23 = vector.broadcast %cst_17 : f32 to vector<8x128xf32>
    %24 = arith.maximumf %22, %23 : vector<8x128xf32>
    %c0_18 = arith.constant 0 : index
    %c0_19 = arith.constant 0 : index
    %25 = vector.load %arg8[%c0_18, %c0_19] : memref<1x128xf32, #tpu.memory_space<vmem>>, vector<1x128xf32>
    %26 = vector.broadcast %25 : vector<1x128xf32> to vector<8x128xf32>
    %27 = arith.mulf %24, %26 : vector<8x128xf32>
    %cst_20 = arith.constant dense<0.000000e+00> : vector<8xf32>
    %28 = vector.multi_reduction <add>, %27, %cst_20 [1] : vector<8x128xf32> to vector<8xf32>
    %29 = vector.shape_cast %28 : vector<8xf32> to vector<8x1xf32>
    %c0_21 = arith.constant 0 : index
    %c0_22 = arith.constant 0 : index
    %30 = vector.load %arg9[%c0_21, %c0_22] : memref<1x1xf32, #tpu.memory_space<vmem>>, vector<1x1xf32>
    %31 = vector.broadcast %30 : vector<1x1xf32> to vector<8x1xf32>
    %32 = arith.addf %29, %31 : vector<8x1xf32>
    %c0_23 = arith.constant 0 : index
    %c0_24 = arith.constant 0 : index
    %33 = vector.load %arg10[%c0_23, %c0_24] : memref<8x1xf32, #tpu.memory_space<vmem>>, vector<8x1xf32>
    tpu.vector_store %arg10[%c0_23, %c0_24], %32 {strides = array<i32>} : memref<8x1xf32, #tpu.memory_space<vmem>>, vector<8x1xf32>,
    return
  }
  func.func @transform_0(%arg0: i32) -> (i32, i32) {
    %c0_i32 = arith.constant 0 : i32
    %c0_i32_0 = arith.constant 0 : i32
    return %arg0, %c0_i32 : i32, i32
  }
  func.func @transform_1(%arg0: i32) -> (i32, i32) {
    %c0_i32 = arith.constant 0 : i32
    %c0_i32_0 = arith.constant 0 : i32
    %c0_i32_1 = arith.constant 0 : i32
    return %c0_i32, %c0_i32_0 : i32, i32
  }
  func.func @transform_2(%arg0: i32) -> (i32, i32) {
    %c0_i32 = arith.constant 0 : i32
    %c0_i32_0 = arith.constant 0 : i32
    %c0_i32_1 = arith.constant 0 : i32
    return %c0_i32, %c0_i32_0 : i32, i32
  }
  func.func @transform_3(%arg0: i32) -> (i32, i32) {
    %c0_i32 = arith.constant 0 : i32
    %c0_i32_0 = arith.constant 0 : i32
    %c0_i32_1 = arith.constant 0 : i32
    return %c0_i32, %c0_i32_0 : i32, i32
  }
  func.func @transform_4(%arg0: i32) -> (i32, i32) {
    %c0_i32 = arith.constant 0 : i32
    %c0_i32_0 = arith.constant 0 : i32
    %c0_i32_1 = arith.constant 0 : i32
    return %c0_i32, %c0_i32_0 : i32, i32
  }
  func.func @transform_5(%arg0: i32) -> (i32, i32) {
    %c0_i32 = arith.constant 0 : i32
    %c0_i32_0 = arith.constant 0 : i32
    %c0_i32_1 = arith.constant 0 : i32
    return %c0_i32, %c0_i32_0 : i32, i32
  }
  func.func @transform_6(%arg0: i32) -> (i32, i32) {
    %c0_i32 = arith.constant 0 : i32
    %c0_i32_0 = arith.constant 0 : i32
    %c0_i32_1 = arith.constant 0 : i32
    return %c0_i32, %c0_i32_0 : i32, i32
  }
  func.func @transform_7(%arg0: i32) -> (i32, i32) {
    %c0_i32 = arith.constant 0 : i32
    %c0_i32_0 = arith.constant 0 : i32
    %c0_i32_1 = arith.constant 0 : i32
    return %c0_i32, %c0_i32_0 : i32, i32
  }
  func.func @transform_8(%arg0: i32) -> (i32, i32) {
    %c0_i32 = arith.constant 0 : i32
    %c0_i32_0 = arith.constant 0 : i32
    %c0_i32_1 = arith.constant 0 : i32
    return %c0_i32, %c0_i32_0 : i32, i32
  }
  func.func @transform_9(%arg0: i32) -> (i32, i32) {
    %c0_i32 = arith.constant 0 : i32
    %c0_i32_0 = arith.constant 0 : i32
    return %arg0, %c0_i32 : i32, i32
  }
}

</mosaic_0001>

<llo_original>
// kernel: tpu_custom_call.1
$region0: #{tpu_custom_call.1}
  #allocation0 [shape = 'u32[]', space=smem, size = 0x4, offset = 0x4, fixed_abs, tag = 'smem constant byte address 0x4 - core index']
  #allocation1 [shape = 'u32[144,128]{1,0:T(1,128)}', space=vmem, size = 0x12000, scoped, tag = 'internal scratch']
  #allocation2 [shape = 'f32[1,1]{1,0:T(1,128)S(1)}', space=vmem, size = 0x200, scoped, tag = 'scoped memory for tpu_custom_call.1']
  %s0 = inlined_call_operand.hbm [shape: f32[16,813], index: 0, kind: input, shape index: {}]
  %s1 = inlined_call_operand.hbm [shape: bf16[813,512], index: 1, kind: input, shape index: {}]
  %s2 = inlined_call_operand.vmem [shape: f32[1,512], index: 2, kind: input, shape index: {}]
  %s3 = inlined_call_operand.hbm [shape: bf16[512,256], index: 3, kind: input, shape index: {}]
  %s4 = inlined_call_operand.vmem [shape: f32[1,256], index: 4, kind: input, shape index: {}]
  %s5 = inlined_call_operand.hbm [shape: bf16[256,128], index: 5, kind: input, shape index: {}]
  %s6 = inlined_call_operand.vmem [shape: f32[1,128], index: 6, kind: input, shape index: {}]
  %s7 = inlined_call_operand.vmem [shape: f32[1,128], index: 7, kind: input, shape index: {}]
  %s8 = inlined_call_operand.<no memory space> [shape: f32[1,1], index: 8, kind: input, shape index: {}]
  %s9 = inlined_call_operand.vmem [shape: f32[16,1], index: 9, kind: output, shape index: {}]
  %s10 = sld [smem:[#allocation0]]
  $region85: #{tpu_custom_call.1} parent=0
    _
  %s12 = ssub.s32 1, %s10
  %s13 = scalar_select 0, %s12, %s10
  %v14 = vstv %s8
  %15 = vst [vmem:[#allocation2] sm:$0x1] %v14
  $region1: #{tpu_custom_call.1} parent=0
    #allocation3 [shape = 'u8[57344]{0}', space=vmem, size = 0xe000, scoped, tag = 'input window, operand 0']
    #allocation4 [shape = 's32[2]{0}', space=sflag, size = 0x8, scoped, tag = 'scoped memory for tpu_custom_call.1']
    #allocation5 [shape = 'u8[835584]{0}', space=vmem, size = 0xcc000, scoped, tag = 'input window, operand 1, single buffered']
    #allocation6 [shape = 's32[1]{0}', space=sflag, size = 0x4, scoped, tag = 'scoped memory for tpu_custom_call.1']
    #allocation7 [shape = 'u8[262144]{0}', space=vmem, size = 0x40000, scoped, tag = 'input window, operand 3, single buffered']
    #allocation8 [shape = 'u8[65536]{0}', space=vmem, size = 0x10000, scoped, tag = 'input window, operand 5, single buffered']
    #allocation9 [shape = 's32[1]{0}', space=sflag, size = 0x4, scoped, tag = 'scoped memory for tpu_custom_call.1']
    %16 = vsyncpa [#allocation4], 0
    %s17 = scalar_lea.sflag [#allocation4], 1
    %18 = vsyncpa %s17, 0
    %19 = vsyncpa [#allocation6], 0
    %20 = vsyncpa [#allocation9], 0
    loop: start=0, step=1, limit=4
    $region2: #{tpu_custom_call.1} parent=1 // loop_pre_header
      _
    $region3: #{tpu_custom_call.1} parent=1 // loop_header
      %s22 = sphi 0, %s26
      %p23 = scmp.ge.s32.totalorder %s22, 4
      %s32 = sphi 0, %s34
      %s35 = sphi 0, %s32
      %s36 = sphi 0, %s35
      %s52 = sphi 0, %s36
      %s56 = sphi 0, %s56
      %s58 = sphi 0, %s56
      %s59 = sphi 0, %s58
      %s73 = sphi 0, %s59
      %s77 = sphi 0, %s77
      %s79 = sphi 0, %s77
      %s80 = sphi 0, %s79
      %s94 = sphi 0, %s80
      %s98 = sphi 0, %s98
      %s100 = sphi 0, %s98
      %s101 = sphi 0, %s100
      %s115 = sphi 0, %s101
      %s119 = sphi 0, %s119
      %s121 = sphi 0, %s119
      %s122 = sphi 0, %s121
      %s136 = sphi 0, %s122
      %s140 = sphi 0, %s140
      %s142 = sphi 0, %s140
      %s143 = sphi 0, %s142
      %s157 = sphi 0, %s143
      %s161 = sphi 0, %s161
      %s163 = sphi 0, %s161
      %s164 = sphi 0, %s163
      %s178 = sphi 0, %s164
      %s182 = sphi 0, %s182
      %s184 = sphi 0, %s182
      %s185 = sphi 0, %s184
      %s199 = sphi 0, %s185
      %s203 = sphi 0, %s203
      %s205 = sphi 0, %s203
      %s206 = sphi 0, %s205
      %s220 = sphi 0, %s206
      %s226 = sphi 0, %s228
      %s229 = sphi 0, %s226
      %s230 = sphi 0, %s229
      %s246 = sphi 0, %s230
    $region4: #{tpu_custom_call.1} parent=1 // loop_header_branch
      %25 = sbr.rel (%p23) target = $region8
    $region5: #{tpu_custom_call.1} parent=1 // loop_body
      %s27 = ssub.s32 %s22, 1
      %s28 = ssub.s32 %s22, 2
      %s29 = sadd.s32 %s22, 1
      %s30 = ssub.s32 %s22, %s29
      %p31 = scmp.eq.s32.totalorder %s30, 0
      %s33 = sadd.s32 %s32, 1
      %s34 = scalar_select %p31, %s32, %s33
      %p37 = pneg %p31
      %p38 = scmp.eq.s32.totalorder %s22, 1
      %p39 = por %p37, %p38
      %p40 = scmp.ne.s32.totalorder %s32, %s35
      %p41 = scmp.eq.s32.totalorder %s22, 0
      %p42 = por %p40, %p41
      %p43 = scmp.ne.s32.totalorder %s32, %s35
      %p44 = scmp.eq.s32.totalorder %s27, 1
      %p45 = por %p43, %p44
      %p46 = scmp.ne.s32.totalorder %s35, %s36
      %p47 = scmp.eq.s32.totalorder %s27, 0
      %p48 = por %p46, %p47
      %p49 = scmp.ne.s32.totalorder %s35, %s36
      %p50 = scmp.eq.s32.totalorder %s28, 1
      %p51 = por %p49, %p50
      %p53 = scmp.ne.s32.totalorder %s36, %s52
      %p54 = scmp.eq.s32.totalorder %s28, 0
      %p55 = por %p53, %p54
      %s57 = sadd.s32 %s56, 1
      %p60 = scmp.eq.s32.totalorder %s22, 1
      %p61 = scmp.ne.s32.totalorder %s56, %s58
      %p62 = scmp.eq.s32.totalorder %s22, 0
      %p63 = por %p61, %p62
      %p64 = scmp.ne.s32.totalorder %s56, %s58
      %p65 = scmp.eq.s32.totalorder %s27, 1
      %p66 = por %p64, %p65
      %p67 = scmp.ne.s32.totalorder %s58, %s59
      %p68 = scmp.eq.s32.totalorder %s27, 0
      %p69 = por %p67, %p68
      %p70 = scmp.ne.s32.totalorder %s58, %s59
      %p71 = scmp.eq.s32.totalorder %s28, 1
      %p72 = por %p70, %p71
      %p74 = scmp.ne.s32.totalorder %s59, %s73
      %p75 = scmp.eq.s32.totalorder %s28, 0
      %p76 = por %p74, %p75
      %s78 = sadd.s32 %s77, 1
      %p81 = scmp.eq.s32.totalorder %s22, 1
      %p82 = scmp.ne.s32.totalorder %s77, %s79
      %p83 = scmp.eq.s32.totalorder %s22, 0
      %p84 = por %p82, %p83
      %p85 = scmp.ne.s32.totalorder %s77, %s79
      %p86 = scmp.eq.s32.totalorder %s27, 1
      %p87 = por %p85, %p86
      %p88 = scmp.ne.s32.totalorder %s79, %s80
      %p89 = scmp.eq.s32.totalorder %s27, 0
      %p90 = por %p88, %p89
      %p91 = scmp.ne.s32.totalorder %s79, %s80
      %p92 = scmp.eq.s32.totalorder %s28, 1
      %p93 = por %p91, %p92
      %p95 = scmp.ne.s32.totalorder %s80, %s94
      %p96 = scmp.eq.s32.totalorder %s28, 0
      %p97 = por %p95, %p96
      %s99 = sadd.s32 %s98, 1
      %p102 = scmp.eq.s32.totalorder %s22, 1
      %p103 = scmp.ne.s32.totalorder %s98, %s100
      %p104 = scmp.eq.s32.totalorder %s22, 0
      %p105 = por %p103, %p104
      %p106 = scmp.ne.s32.totalorder %s98, %s100
      %p107 = scmp.eq.s32.totalorder %s27, 1
      %p108 = por %p106, %p107
      %p109 = scmp.ne.s32.totalorder %s100, %s101
      %p110 = scmp.eq.s32.totalorder %s27, 0
      %p111 = por %p109, %p110
      %p112 = scmp.ne.s32.totalorder %s100, %s101
      %p113 = scmp.eq.s32.totalorder %s28, 1
      %p114 = por %p112, %p113
      %p116 = scmp.ne.s32.totalorder %s101, %s115
      %p117 = scmp.eq.s32.totalorder %s28, 0
      %p118 = por %p116, %p117
      %s120 = sadd.s32 %s119, 1
      %p123 = scmp.eq.s32.totalorder %s22, 1
      %p124 = scmp.ne.s32.totalorder %s119, %s121
      %p125 = scmp.eq.s32.totalorder %s22, 0
      %p126 = por %p124, %p125
      %p127 = scmp.ne.s32.totalorder %s119, %s121
      %p128 = scmp.eq.s32.totalorder %s27, 1
      %p129 = por %p127, %p128
      %p130 = scmp.ne.s32.totalorder %s121, %s122
      %p131 = scmp.eq.s32.totalorder %s27, 0
      %p132 = por %p130, %p131
      %p133 = scmp.ne.s32.totalorder %s121, %s122
      %p134 = scmp.eq.s32.totalorder %s28, 1
      %p135 = por %p133, %p134
      %p137 = scmp.ne.s32.totalorder %s122, %s136
      %p138 = scmp.eq.s32.totalorder %s28, 0
      %p139 = por %p137, %p138
      %s141 = sadd.s32 %s140, 1
      %p144 = scmp.eq.s32.totalorder %s22, 1
      %p145 = scmp.ne.s32.totalorder %s140, %s142
      %p146 = scmp.eq.s32.totalorder %s22, 0
      %p147 = por %p145, %p146
      %p148 = scmp.ne.s32.totalorder %s140, %s142
      %p149 = scmp.eq.s32.totalorder %s27, 1
      %p150 = por %p148, %p149
      %p151 = scmp.ne.s32.totalorder %s142, %s143
      %p152 = scmp.eq.s32.totalorder %s27, 0
      %p153 = por %p151, %p152
      %p154 = scmp.ne.s32.totalorder %s142, %s143
      %p155 = scmp.eq.s32.totalorder %s28, 1
      %p156 = por %p154, %p155
      %p158 = scmp.ne.s32.totalorder %s143, %s157
      %p159 = scmp.eq.s32.totalorder %s28, 0
      %p160 = por %p158, %p159
      %s162 = sadd.s32 %s161, 1
      %p165 = scmp.eq.s32.totalorder %s22, 1
      %p166 = scmp.ne.s32.totalorder %s161, %s163
      %p167 = scmp.eq.s32.totalorder %s22, 0
      %p168 = por %p166, %p167
      %p169 = scmp.ne.s32.totalorder %s161, %s163
      %p170 = scmp.eq.s32.totalorder %s27, 1
      %p171 = por %p169, %p170
      %p172 = scmp.ne.s32.totalorder %s163, %s164
      %p173 = scmp.eq.s32.totalorder %s27, 0
      %p174 = por %p172, %p173
      %p175 = scmp.ne.s32.totalorder %s163, %s164
      %p176 = scmp.eq.s32.totalorder %s28, 1
      %p177 = por %p175, %p176
      %p179 = scmp.ne.s32.totalorder %s164, %s178
      %p180 = scmp.eq.s32.totalorder %s28, 0
      %p181 = por %p179, %p180
      %s183 = sadd.s32 %s182, 1
      %p186 = scmp.eq.s32.totalorder %s22, 1
      %p187 = scmp.ne.s32.totalorder %s182, %s184
      %p188 = scmp.eq.s32.totalorder %s22, 0
      %p189 = por %p187, %p188
      %p190 = scmp.ne.s32.totalorder %s182, %s184
      %p191 = scmp.eq.s32.totalorder %s27, 1
      %p192 = por %p190, %p191
      %p193 = scmp.ne.s32.totalorder %s184, %s185
      %p194 = scmp.eq.s32.totalorder %s27, 0
      %p195 = por %p193, %p194
      %p196 = scmp.ne.s32.totalorder %s184, %s185
      %p197 = scmp.eq.s32.totalorder %s28, 1
      %p198 = por %p196, %p197
      %p200 = scmp.ne.s32.totalorder %s185, %s199
      %p201 = scmp.eq.s32.totalorder %s28, 0
      %p202 = por %p200, %p201
      %s204 = sadd.s32 %s203, 1
      %p207 = scmp.eq.s32.totalorder %s22, 1
      %p208 = scmp.ne.s32.totalorder %s203, %s205
      %p209 = scmp.eq.s32.totalorder %s22, 0
      %p210 = por %p208, %p209
      %p211 = scmp.ne.s32.totalorder %s203, %s205
      %p212 = scmp.eq.s32.totalorder %s27, 1
      %p213 = por %p211, %p212
      %p214 = scmp.ne.s32.totalorder %s205, %s206
      %p215 = scmp.eq.s32.totalorder %s27, 0
      %p216 = por %p214, %p215
      %p217 = scmp.ne.s32.totalorder %s205, %s206
      %p218 = scmp.eq.s32.totalorder %s28, 1
      %p219 = por %p217, %p218
      %p221 = scmp.ne.s32.totalorder %s206, %s220
      %p222 = scmp.eq.s32.totalorder %s28, 0
      %p223 = por %p221, %p222
      %s224 = ssub.s32 %s22, %s29
      %p225 = scmp.eq.s32.totalorder %s224, 0
      %s227 = sadd.s32 %s226, 1
      %s228 = scalar_select %p225, %s226, %s227
      %p231 = pneg %p225
      %p232 = scmp.eq.s32.totalorder %s22, 1
      %p233 = por %p231, %p232
      %p234 = scmp.ne.s32.totalorder %s226, %s229
      %p235 = scmp.eq.s32.totalorder %s22, 0
      %p236 = por %p234, %p235
      %p237 = scmp.ne.s32.totalorder %s226, %s229
      %p238 = scmp.eq.s32.totalorder %s27, 1
      %p239 = por %p237, %p238
      %p240 = scmp.ne.s32.totalorder %s229, %s230
      %p241 = scmp.eq.s32.totalorder %s27, 0
      %p242 = por %p240, %p241
      %p243 = scmp.ne.s32.totalorder %s229, %s230
      %p244 = scmp.eq.s32.totalorder %s28, 1
      %p245 = por %p243, %p244
      %p247 = scmp.ne.s32.totalorder %s230, %s246
      %p248 = scmp.eq.s32.totalorder %s28, 0
      %p249 = por %p247, %p248
      %p250 = scmp.le.s32.totalorder 1, %s22
      %p251 = scmp.lt.s32.totalorder %s22, 3
      %p252 = pnand %p250, %p251
      %p253 = pneg %p252
      // Predicated region
      $region9: #{tpu_custom_call.1} parent=5 // pred_check
        _
      $region10: #{tpu_custom_call.1} parent=5 // pred_check_branch
        %255 = sbr.rel (%p252) target = $region12
      $region11: #{tpu_custom_call.1} parent=5 // pred_region
        %s256 = ssub.s32 %s22, 1
        // Predicated region
        $region13: #{tpu_custom_call.1} parent=11 // pred_check
          %p257 = pneg %p69
        $region14: #{tpu_custom_call.1} parent=11 // pred_check_branch
          %259 = sbr.rel (%p257) target = $region16
        $region15: #{tpu_custom_call.1} parent=11 // pred_region
          %s261 = ssub.s32 26112, 26112
          %262 = vsyncadd [#allocation6], %s261
          %s263 = sshll.u32 [#allocation5], 4
          %s264 = int_to_ptr.vmem [resolvable:$true] %s263
          %269 = dma.hbm_to_vmem [thread:$0]  %s1, 26112, %s264, [#allocation6], 256, 256, 16
        $region16: #{tpu_custom_call.1} parent=11 // pred_fallthru
          _
        // Predicated region
        $region17: #{tpu_custom_call.1} parent=11 // pred_check
          %p270 = pneg %p90
        $region18: #{tpu_custom_call.1} parent=11 // pred_check_branch
          %272 = sbr.rel (%p270) target = $region20
        $region19: #{tpu_custom_call.1} parent=11 // pred_region
          _
        $region20: #{tpu_custom_call.1} parent=11 // pred_fallthru
          _
        // Predicated region
        $region21: #{tpu_custom_call.1} parent=11 // pred_check
          %p273 = pneg %p111
        $region22: #{tpu_custom_call.1} parent=11 // pred_check_branch
          %275 = sbr.rel (%p273) target = $region24
        $region23: #{tpu_custom_call.1} parent=11 // pred_region
          %s277 = ssub.s32 8192, 8192
          %278 = vsyncadd [#allocation6], %s277
          %s279 = sshll.u32 [#allocation7], 4
          %s280 = int_to_ptr.vmem [resolvable:$true] %s279
          %285 = dma.hbm_to_vmem [thread:$0]  %s3, 8192, %s280, [#allocation6], 128, 128, 8
        $region24: #{tpu_custom_call.1} parent=11 // pred_fallthru
          _
        // Predicated region
        $region25: #{tpu_custom_call.1} parent=11 // pred_check
          %p286 = pneg %p132
        $region26: #{tpu_custom_call.1} parent=11 // pred_check_branch
          %288 = sbr.rel (%p286) target = $region28
        $region27: #{tpu_custom_call.1} parent=11 // pred_region
          _
        $region28: #{tpu_custom_call.1} parent=11 // pred_fallthru
          _
        // Predicated region
        $region29: #{tpu_custom_call.1} parent=11 // pred_check
          %p289 = pneg %p153
        $region30: #{tpu_custom_call.1} parent=11 // pred_check_branch
          %291 = sbr.rel (%p289) target = $region32
        $region31: #{tpu_custom_call.1} parent=11 // pred_region
          %s293 = ssub.s32 2048, 2048
          %294 = vsyncadd [#allocation9], %s293
          %s295 = sshll.u32 [#allocation8], 4
          %s296 = int_to_ptr.vmem [resolvable:$true] %s295
          %301 = dma.hbm_to_vmem [thread:$0]  %s5, 2048, %s296, [#allocation9], 64, 64, 4
        $region32: #{tpu_custom_call.1} parent=11 // pred_fallthru
          _
        // Predicated region
        $region33: #{tpu_custom_call.1} parent=11 // pred_check
          %p302 = pneg %p174
        $region34: #{tpu_custom_call.1} parent=11 // pred_check_branch
          %304 = sbr.rel (%p302) target = $region36
        $region35: #{tpu_custom_call.1} parent=11 // pred_region
          _
        $region36: #{tpu_custom_call.1} parent=11 // pred_fallthru
          _
        // Predicated region
        $region37: #{tpu_custom_call.1} parent=11 // pred_check
          %p305 = pneg %p195
        $region38: #{tpu_custom_call.1} parent=11 // pred_check_branch
          %307 = sbr.rel (%p305) target = $region40
        $region39: #{tpu_custom_call.1} parent=11 // pred_region
          _
        $region40: #{tpu_custom_call.1} parent=11 // pred_fallthru
          _
        // Predicated region
        $region41: #{tpu_custom_call.1} parent=11 // pred_check
          %p308 = pneg %p216
        $region42: #{tpu_custom_call.1} parent=11 // pred_check_branch
          %310 = sbr.rel (%p308) target = $region44
        $region43: #{tpu_custom_call.1} parent=11 // pred_region
          _
        $region44: #{tpu_custom_call.1} parent=11 // pred_fallthru
          _
      $region12: #{tpu_custom_call.1} parent=5 // pred_fallthru
        _
      %p311 = scmp.lt.s32.totalorder %s22, 2
      // Predicated region
      $region45: #{tpu_custom_call.1} parent=5 // pred_check
        %p312 = pneg %p311
      $region46: #{tpu_custom_call.1} parent=5 // pred_check_branch
        %314 = sbr.rel (%p312) target = $region48
      $region47: #{tpu_custom_call.1} parent=5 // pred_region
        // Predicated region
        $region49: #{tpu_custom_call.1} parent=47 // pred_check
          %p315 = pneg %p42
        $region50: #{tpu_custom_call.1} parent=47 // pred_check_branch
          %317 = sbr.rel (%p315) target = $region52
        $region51: #{tpu_custom_call.1} parent=47 // pred_region
          %s318 = sand.u32 %s32, 1
          %s319 = scalar_lea.sflag [#allocation4], %s318
          %s320 = sand.u32 %s32, 1
          %s321 = smul.addr %s320, 56
          %s322 = scalar_lea.vmem [#allocation3], %s321
          %s324 = ssub.s32 896, 896
          %325 = vsyncadd %s319, %s324
          %s326 = smul.addr %s22, 7
          %s327 = smul.addr %s326, 128
          %s328 = scalar_lea.hbm %s0, %s327
          %s330 = sshll.u32 %s322, 4
          %s331 = int_to_ptr.vmem [resolvable:$true] %s330
          %333 = dma.hbm_to_vmem [thread:$0]  %s328, 896, %s331, %s319
        $region52: #{tpu_custom_call.1} parent=47 // pred_fallthru
          _
      $region48: #{tpu_custom_call.1} parent=5 // pred_fallthru
        _
      %p334 = scmp.le.s32.totalorder 1, %s22
      %p335 = scmp.lt.s32.totalorder %s22, 3
      %p336 = pnand %p334, %p335
      %p337 = pneg %p336
      // Predicated region
      $region53: #{tpu_custom_call.1} parent=5 // pred_check
        _
      $region54: #{tpu_custom_call.1} parent=5 // pred_check_branch
        %339 = sbr.rel (%p336) target = $region56
      $region55: #{tpu_custom_call.1} parent=5 // pred_region
        %s340 = ssub.s32 %s22, 1
        %s341 = sand.u32 %s35, 1
        %s342 = scalar_lea.sflag [#allocation4], %s341
        %s343 = sand.u32 %s35, 1
        %s344 = smul.addr %s343, 56
        %s345 = scalar_lea.vmem [#allocation3], %s344
        // Predicated region
        $region57: #{tpu_custom_call.1} parent=55 // pred_check
          %p346 = pneg %p48
        $region58: #{tpu_custom_call.1} parent=55 // pred_check_branch
          %348 = sbr.rel (%p346) target = $region60
        $region59: #{tpu_custom_call.1} parent=55 // pred_region
          %349 = dma.done %s342, 896
        $region60: #{tpu_custom_call.1} parent=55 // pred_fallthru
          _
        // Predicated region
        $region61: #{tpu_custom_call.1} parent=55 // pred_check
          %p350 = pneg %p69
        $region62: #{tpu_custom_call.1} parent=55 // pred_check_branch
          %352 = sbr.rel (%p350) target = $region64
        $region63: #{tpu_custom_call.1} parent=55 // pred_region
          %353 = dma.done [#allocation6], 26112
        $region64: #{tpu_custom_call.1} parent=55 // pred_fallthru
          _
        // Predicated region
        $region65: #{tpu_custom_call.1} parent=55 // pred_check
          %p354 = pneg %p111
        $region66: #{tpu_custom_call.1} parent=55 // pred_check_branch
          %356 = sbr.rel (%p354) target = $region68
        $region67: #{tpu_custom_call.1} parent=55 // pred_region
          %357 = dma.done [#allocation6], 8192
        $region68: #{tpu_custom_call.1} parent=55 // pred_fallthru
          _
        // Predicated region
        $region69: #{tpu_custom_call.1} parent=55 // pred_check
          %p358 = pneg %p153
        $region70: #{tpu_custom_call.1} parent=55 // pred_check_branch
          %360 = sbr.rel (%p358) target = $region72
        $region71: #{tpu_custom_call.1} parent=55 // pred_region
          %361 = dma.done [#allocation9], 2048
        $region72: #{tpu_custom_call.1} parent=55 // pred_fallthru
          _
        %s362 = sand.u32 %s35, 1
        %s363 = scalar_lea.sflag [#allocation4], %s362
        %s364 = sand.u32 %s35, 1
        %s365 = smul.addr %s364, 56
        %s366 = scalar_lea.vmem [#allocation3], %s365
        %p367 = pneg %p48
        %p368 = pneg %p45
        %p369 = pneg %p69
        %p370 = pneg %p66
        %p371 = pneg %p90
        %p372 = pneg %p87
        %p373 = pneg %p111
        %p374 = pneg %p108
        %p375 = pneg %p132
        %p376 = pneg %p129
        %p377 = pneg %p153
        %p378 = pneg %p150
        %p379 = pneg %p174
        %p380 = pneg %p171
        %p381 = pneg %p195
        %p382 = pneg %p192
        %p383 = pneg %p216
        %p384 = pneg %p213
        %p385 = pneg %p242
        %p386 = pneg %p239
        %p387 = scmp.lt.s32.totalorder %s27, 1
        %s388 = scalar_select %p387, %s27, 1
        %s389 = smul.addr %s388, 8
        %s390 = scalar_lea.vmem %s9, %s389
        %p391 = scmp.lt.s32.totalorder %s27, 1
        %s392 = scalar_select %p391, %s27, 1
        %s393 = smul.addr %s392, 8
        %s394 = scalar_lea.vmem %s9, %s393
        %v396 = vld [vmem:[%s345] sm:$0xff]
        %v397 = vld [vmem:[%s345 + $0x8] sm:$0xff]
        %v398 = vld [vmem:[%s345 + $0x10] sm:$0xff]
        %v399 = vld [vmem:[%s345 + $0x18] sm:$0xff]
        %v400 = vld [vmem:[%s345 + $0x20] sm:$0xff]
        %v401 = vld [vmem:[%s345 + $0x28] sm:$0xff]
        %v402 = vld [vmem:[%s345 + $0x30] sm:$0xff]
        %v403 = vpack.c.bf16 %v396, %v396
        %v404 = vpack.c.bf16 %v397, %v397
        %v405 = vpack.c.bf16 %v398, %v398
        %v406 = vpack.c.bf16 %v399, %v399
        %v407 = vpack.c.bf16 %v400, %v400
        %v408 = vpack.c.bf16 %v401, %v401
        %v409 = vpack.c.bf16 %v402, %v402
        %v410 = vld [vmem:[#allocation5] sm:$0xff]
        %v411 = vld [vmem:[#allocation5 + $0x8] sm:$0xff]
        %v412 = vld [vmem:[#allocation5 + $0x10] sm:$0xff]
        %v413 = vld [vmem:[#allocation5 + $0x18] sm:$0xff]
        %v414 = vld [vmem:[#allocation5 + $0x20] sm:$0xff]
        %v415 = vld [vmem:[#allocation5 + $0x28] sm:$0xff]
        %v416 = vld [vmem:[#allocation5 + $0x30] sm:$0xff]
        %v417 = vld [vmem:[#allocation5 + $0x38] sm:$0xff]
        %v418 = vld [vmem:[#allocation5 + $0x40] sm:$0xff]
        %v419 = vld [vmem:[#allocation5 + $0x48] sm:$0xff]
        %v420 = vld [vmem:[#allocation5 + $0x50] sm:$0xff]
        %v421 = vld [vmem:[#allocation5 + $0x58] sm:$0xff]
        %v422 = vld [vmem:[#allocation5 + $0x60] sm:$0xff]
        %v423 = vld [vmem:[#allocation5 + $0x68] sm:$0xff]
        %v424 = vld [vmem:[#allocation5 + $0x70] sm:$0xff]
        %v425 = vld [vmem:[#allocation5 + $0x78] sm:$0xff]
        %v426 = vld [vmem:[#allocation5 + $0x80] sm:$0xff]
        %v427 = vld [vmem:[#allocation5 + $0x88] sm:$0xff]
        %v428 = vld [vmem:[#allocation5 + $0x90] sm:$0xff]
        %v429 = vld [vmem:[#allocation5 + $0x98] sm:$0xff]
        %v430 = vld [vmem:[#allocation5 + $0xa0] sm:$0xff]
        %v431 = vld [vmem:[#allocation5 + $0xa8] sm:$0xff]
        %v432 = vld [vmem:[#allocation5 + $0xb0] sm:$0xff]
        %v433 = vld [vmem:[#allocation5 + $0xb8] sm:$0xff]
        %v434 = vld [vmem:[#allocation5 + $0xc0] sm:$0xff]
        %v435 = vld [vmem:[#allocation5 + $0xc8] sm:$0xff]
        %v436 = vld [vmem:[#allocation5 + $0xd0] sm:$0xff]
        %v437 = vld [vmem:[#allocation5 + $0xd8] sm:$0xff]
        %v438 = vld [vmem:[#allocation5 + $0xe0] sm:$0xff]
        %v439 = vld [vmem:[#allocation5 + $0xe8] sm:$0xff]
        %v440 = vld [vmem:[#allocation5 + $0xf0] sm:$0xff]
        %v441 = vld [vmem:[#allocation5 + $0xf8] sm:$0xff]
        %v442 = vld [vmem:[#allocation5 + $0x100] sm:$0xff]
        %v443 = vld [vmem:[#allocation5 + $0x108] sm:$0xff]
        %v444 = vld [vmem:[#allocation5 + $0x110] sm:$0xff]
        %v445 = vld [vmem:[#allocation5 + $0x118] sm:$0xff]
        %v446 = vld [vmem:[#allocation5 + $0x120] sm:$0xff]
        %v447 = vld [vmem:[#allocation5 + $0x128] sm:$0xff]
        %v448 = vld [vmem:[#allocation5 + $0x130] sm:$0xff]
        %v449 = vld [vmem:[#allocation5 + $0x138] sm:$0xff]
        %v450 = vld [vmem:[#allocation5 + $0x140] sm:$0xff]
        %v451 = vld [vmem:[#allocation5 + $0x148] sm:$0xff]
        %v452 = vld [vmem:[#allocation5 + $0x150] sm:$0xff]
        %v453 = vld [vmem:[#allocation5 + $0x158] sm:$0xff]
        %v454 = vld [vmem:[#allocation5 + $0x160] sm:$0xff]
        %v455 = vld [vmem:[#allocation5 + $0x168] sm:$0xff]
        %v456 = vld [vmem:[#allocation5 + $0x170] sm:$0xff]
        %v457 = vld [vmem:[#allocation5 + $0x178] sm:$0xff]
        %v458 = vld [vmem:[#allocation5 + $0x180] sm:$0xff]
        %v459 = vld [vmem:[#allocation5 + $0x188] sm:$0xff]
        %v460 = vld [vmem:[#allocation5 + $0x190] sm:$0xff]
        %v461 = vld [vmem:[#allocation5 + $0x198] sm:$0xff]
        %v462 = vld [vmem:[#allocation5 + $0x1a0] sm:$0xff]
        %v463 = vld [vmem:[#allocation5 + $0x1a8] sm:$0xff]
        %v464 = vld [vmem:[#allocation5 + $0x1b0] sm:$0xff]
        %v465 = vld [vmem:[#allocation5 + $0x1b8] sm:$0xff]
        %v466 = vld [vmem:[#allocation5 + $0x1c0] sm:$0xff]
        %v467 = vld [vmem:[#allocation5 + $0x1c8] sm:$0xff]
        %v468 = vld [vmem:[#allocation5 + $0x1d0] sm:$0xff]
        %v469 = vld [vmem:[#allocation5 + $0x1d8] sm:$0xff]
        %v470 = vld [vmem:[#allocation5 + $0x1e0] sm:$0xff]
        %v471 = vld [vmem:[#allocation5 + $0x1e8] sm:$0xff]
        %v472 = vld [vmem:[#allocation5 + $0x1f0] sm:$0xff]
        %v473 = vld [vmem:[#allocation5 + $0x1f8] sm:$0xff]
        %v474 = vld [vmem:[#allocation5 + $0x200] sm:$0xff]
        %v475 = vld [vmem:[#allocation5 + $0x208] sm:$0xff]
        %v476 = vld [vmem:[#allocation5 + $0x210] sm:$0xff]
        %v477 = vld [vmem:[#allocation5 + $0x218] sm:$0xff]
        %v478 = vld [vmem:[#allocation5 + $0x220] sm:$0xff]
        %v479 = vld [vmem:[#allocation5 + $0x228] sm:$0xff]
        %v480 = vld [vmem:[#allocation5 + $0x230] sm:$0xff]
        %v481 = vld [vmem:[#allocation5 + $0x238] sm:$0xff]
        %v482 = vld [vmem:[#allocation5 + $0x240] sm:$0xff]
        %v483 = vld [vmem:[#allocation5 + $0x248] sm:$0xff]
        %v484 = vld [vmem:[#allocation5 + $0x250] sm:$0xff]
        %v485 = vld [vmem:[#allocation5 + $0x258] sm:$0xff]
        %v486 = vld [vmem:[#allocation5 + $0x260] sm:$0xff]
        %v487 = vld [vmem:[#allocation5 + $0x268] sm:$0xff]
        %v488 = vld [vmem:[#allocation5 + $0x270] sm:$0xff]
        %v489 = vld [vmem:[#allocation5 + $0x278] sm:$0xff]
        %v490 = vld [vmem:[#allocation5 + $0x280] sm:$0xff]
        %v491 = vld [vmem:[#allocation5 + $0x288] sm:$0xff]
        %v492 = vld [vmem:[#allocation5 + $0x290] sm:$0xff]
        %v493 = vld [vmem:[#allocation5 + $0x298] sm:$0xff]
        %v494 = vld [vmem:[#allocation5 + $0x2a0] sm:$0xff]
        %v495 = vld [vmem:[#allocation5 + $0x2a8] sm:$0xff]
        %v496 = vld [vmem:[#allocation5 + $0x2b0] sm:$0xff]
        %v497 = vld [vmem:[#allocation5 + $0x2b8] sm:$0xff]
        %v498 = vld [vmem:[#allocation5 + $0x2c0] sm:$0xff]
        %v499 = vld [vmem:[#allocation5 + $0x2c8] sm:$0xff]
        %v500 = vld [vmem:[#allocation5 + $0x2d0] sm:$0xff]
        %v501 = vld [vmem:[#allocation5 + $0x2d8] sm:$0xff]
        %v502 = vld [vmem:[#allocation5 + $0x2e0] sm:$0xff]
        %v503 = vld [vmem:[#allocation5 + $0x2e8] sm:$0xff]
        %v504 = vld [vmem:[#allocation5 + $0x2f0] sm:$0xff]
        %v505 = vld [vmem:[#allocation5 + $0x2f8] sm:$0xff]
        %v506 = vld [vmem:[#allocation5 + $0x300] sm:$0xff]
        %v507 = vld [vmem:[#allocation5 + $0x308] sm:$0xff]
        %v508 = vld [vmem:[#allocation5 + $0x310] sm:$0xff]
        %v509 = vld [vmem:[#allocation5 + $0x318] sm:$0xff]
        %v510 = vld [vmem:[#allocation5 + $0x320] sm:$0xff]
        %v511 = vld [vmem:[#allocation5 + $0x328] sm:$0xff]
        %v512 = vld [vmem:[#allocation5 + $0x330] sm:$0xff]
        %v513 = vld [vmem:[#allocation5 + $0x338] sm:$0xff]
        %v514 = vld [vmem:[#allocation5 + $0x340] sm:$0xff]
        %v515 = vld [vmem:[#allocation5 + $0x348] sm:$0xff]
        %v516 = vld [vmem:[#allocation5 + $0x350] sm:$0xff]
        %v517 = vld [vmem:[#allocation5 + $0x358] sm:$0xff]
        %v518 = vld [vmem:[#allocation5 + $0x360] sm:$0xff]
        %v519 = vld [vmem:[#allocation5 + $0x368] sm:$0xff]
        %v520 = vld [vmem:[#allocation5 + $0x370] sm:$0xff]
        %v521 = vld [vmem:[#allocation5 + $0x378] sm:$0xff]
        %v522 = vld [vmem:[#allocation5 + $0x380] sm:$0xff]
        %v523 = vld [vmem:[#allocation5 + $0x388] sm:$0xff]
        %v524 = vld [vmem:[#allocation5 + $0x390] sm:$0xff]
        %v525 = vld [vmem:[#allocation5 + $0x398] sm:$0xff]
        %v526 = vld [vmem:[#allocation5 + $0x3a0] sm:$0xff]
        %v527 = vld [vmem:[#allocation5 + $0x3a8] sm:$0xff]
        %v528 = vld [vmem:[#allocation5 + $0x3b0] sm:$0xff]
        %v529 = vld [vmem:[#allocation5 + $0x3b8] sm:$0xff]
        %v530 = vld [vmem:[#allocation5 + $0x3c0] sm:$0xff]
        %v531 = vld [vmem:[#allocation5 + $0x3c8] sm:$0xff]
        %v532 = vld [vmem:[#allocation5 + $0x3d0] sm:$0xff]
        %v533 = vld [vmem:[#allocation5 + $0x3d8] sm:$0xff]
        %v534 = vld [vmem:[#allocation5 + $0x3e0] sm:$0xff]
        %v535 = vld [vmem:[#allocation5 + $0x3e8] sm:$0xff]
        %v536 = vld [vmem:[#allocation5 + $0x3f0] sm:$0xff]
        %v537 = vld [vmem:[#allocation5 + $0x3f8] sm:$0xff]
        %v538 = vld [vmem:[#allocation5 + $0x400] sm:$0xff]
        %v539 = vld [vmem:[#allocation5 + $0x408] sm:$0xff]
        %v540 = vld [vmem:[#allocation5 + $0x410] sm:$0xff]
        %v541 = vld [vmem:[#allocation5 + $0x418] sm:$0xff]
        %v542 = vld [vmem:[#allocation5 + $0x420] sm:$0xff]
        %v543 = vld [vmem:[#allocation5 + $0x428] sm:$0xff]
        %v544 = vld [vmem:[#allocation5 + $0x430] sm:$0xff]
        %v545 = vld [vmem:[#allocation5 + $0x438] sm:$0xff]
        %v546 = vld [vmem:[#allocation5 + $0x440] sm:$0xff]
        %v547 = vld [vmem:[#allocation5 + $0x448] sm:$0xff]
        %v548 = vld [vmem:[#allocation5 + $0x450] sm:$0xff]
        %v549 = vld [vmem:[#allocation5 + $0x458] sm:$0xff]
        %v550 = vld [vmem:[#allocation5 + $0x460] sm:$0xff]
        %v551 = vld [vmem:[#allocation5 + $0x468] sm:$0xff]
        %v552 = vld [vmem:[#allocation5 + $0x470] sm:$0xff]
        %v553 = vld [vmem:[#allocation5 + $0x478] sm:$0xff]
        %v554 = vld [vmem:[#allocation5 + $0x480] sm:$0xff]
        %v555 = vld [vmem:[#allocation5 + $0x488] sm:$0xff]
        %v556 = vld [vmem:[#allocation5 + $0x490] sm:$0xff]
        %v557 = vld [vmem:[#allocation5 + $0x498] sm:$0xff]
        %v558 = vld [vmem:[#allocation5 + $0x4a0] sm:$0xff]
        %v559 = vld [vmem:[#allocation5 + $0x4a8] sm:$0xff]
        %v560 = vld [vmem:[#allocation5 + $0x4b0] sm:$0xff]
        %v561 = vld [vmem:[#allocation5 + $0x4b8] sm:$0xff]
        %v562 = vld [vmem:[#allocation5 + $0x4c0] sm:$0xff]
        %v563 = vld [vmem:[#allocation5 + $0x4c8] sm:$0xff]
        %v564 = vld [vmem:[#allocation5 + $0x4d0] sm:$0xff]
        %v565 = vld [vmem:[#allocation5 + $0x4d8] sm:$0xff]
        %v566 = vld [vmem:[#allocation5 + $0x4e0] sm:$0xff]
        %v567 = vld [vmem:[#allocation5 + $0x4e8] sm:$0xff]
        %v568 = vld [vmem:[#allocation5 + $0x4f0] sm:$0xff]
        %v569 = vld [vmem:[#allocation5 + $0x4f8] sm:$0xff]
        %v570 = vld [vmem:[#allocation5 + $0x500] sm:$0xff]
        %v571 = vld [vmem:[#allocation5 + $0x508] sm:$0xff]
        %v572 = vld [vmem:[#allocation5 + $0x510] sm:$0xff]
        %v573 = vld [vmem:[#allocation5 + $0x518] sm:$0xff]
        %v574 = vld [vmem:[#allocation5 + $0x520] sm:$0xff]
        %v575 = vld [vmem:[#allocation5 + $0x528] sm:$0xff]
        %v576 = vld [vmem:[#allocation5 + $0x530] sm:$0xff]
        %v577 = vld [vmem:[#allocation5 + $0x538] sm:$0xff]
        %v578 = vld [vmem:[#allocation5 + $0x540] sm:$0xff]
        %v579 = vld [vmem:[#allocation5 + $0x548] sm:$0xff]
        %v580 = vld [vmem:[#allocation5 + $0x550] sm:$0xff]
        %v581 = vld [vmem:[#allocation5 + $0x558] sm:$0xff]
        %v582 = vld [vmem:[#allocation5 + $0x560] sm:$0xff]
        %v583 = vld [vmem:[#allocation5 + $0x568] sm:$0xff]
        %v584 = vld [vmem:[#allocation5 + $0x570] sm:$0xff]
        %v585 = vld [vmem:[#allocation5 + $0x578] sm:$0xff]
        %v586 = vld [vmem:[#allocation5 + $0x580] sm:$0xff]
        %v587 = vld [vmem:[#allocation5 + $0x588] sm:$0xff]
        %v588 = vld [vmem:[#allocation5 + $0x590] sm:$0xff]
        %v589 = vld [vmem:[#allocation5 + $0x598] sm:$0xff]
        %v590 = vld [vmem:[#allocation5 + $0x5a0] sm:$0xff]
        %v591 = vld [vmem:[#allocation5 + $0x5a8] sm:$0xff]
        %v592 = vld [vmem:[#allocation5 + $0x5b0] sm:$0xff]
        %v593 = vld [vmem:[#allocation5 + $0x5b8] sm:$0xff]
        %v594 = vld [vmem:[#allocation5 + $0x5c0] sm:$0xff]
        %v595 = vld [vmem:[#allocation5 + $0x5c8] sm:$0xff]
        %v596 = vld [vmem:[#allocation5 + $0x5d0] sm:$0xff]
        %v597 = vld [vmem:[#allocation5 + $0x5d8] sm:$0xff]
        %v598 = vld [vmem:[#allocation5 + $0x5e0] sm:$0xff]
        %v599 = vld [vmem:[#allocation5 + $0x5e8] sm:$0xff]
        %v600 = vld [vmem:[#allocation5 + $0x5f0] sm:$0xff]
        %v601 = vld [vmem:[#allocation5 + $0x5f8] sm:$0xff]
        %v602 = vld [vmem:[#allocation5 + $0x600] sm:$0xff]
        %v603 = vld [vmem:[#allocation5 + $0x608] sm:$0xff]
        %v604 = vld [vmem:[#allocation5 + $0x610] sm:$0xff]
        %v605 = vld [vmem:[#allocation5 + $0x618] sm:$0xff]
        %v606 = vld [vmem:[#allocation5 + $0x620] sm:$0xff]
        %v607 = vld [vmem:[#allocation5 + $0x628] sm:$0xff]
        %v608 = vld [vmem:[#allocation5 + $0x630] sm:$0xff]
        %v609 = vld [vmem:[#allocation5 + $0x638] sm:$0xff]
        %v610 = vld [vmem:[#allocation5 + $0x640] sm:$0xff]
        %v611 = vld [vmem:[#allocation5 + $0x648] sm:$0xff]
        %v612 = vld [vmem:[#allocation5 + $0x650] sm:$0x77]
        %v613 = vld [vmem:[#allocation5 + $0x658] sm:$0x77]
        %v614 = vld [vmem:[%s2] sm:$0xf]
        %v616 = vlaneseq
        %v617 = vshrl.u32 %v616, 7
        %v618 = vsub.s32 0, %v617
        %v619 = vrot.slane %v614, %v618
        %v620 = vlaneseq
        %v621 = vshrl.u32 %v620, 7
        %v622 = vsub.s32 1, %v621
        %v623 = vrot.slane %v614, %v622
        %v624 = vlaneseq
        %v625 = vshrl.u32 %v624, 7
        %v626 = vsub.s32 2, %v625
        %v627 = vrot.slane %v614, %v626
        %v628 = vlaneseq
        %v629 = vshrl.u32 %v628, 7
        %v630 = vsub.s32 3, %v629
        %v631 = vrot.slane %v614, %v630
        %v840 = vunpack.c.l.b16 %v410
        %v841 = vunpack.c.h.b16 %v410
        %v842 = vunpack.c.l.b16 %v411
        %v843 = vunpack.c.h.b16 %v411
        %v844 = vunpack.c.l.b16 %v412
        %v845 = vunpack.c.h.b16 %v412
        %v846 = vunpack.c.l.b16 %v413
        %v847 = vunpack.c.h.b16 %v413
        %v848 = vunpack.c.l.b16 %v414
        %v849 = vunpack.c.h.b16 %v414
        %v850 = vunpack.c.l.b16 %v415
        %v851 = vunpack.c.h.b16 %v415
        %v852 = vunpack.c.l.b16 %v416
        %v853 = vunpack.c.h.b16 %v416
        %v854 = vunpack.c.l.b16 %v417
        %v855 = vunpack.c.h.b16 %v417
        %v856 = vunpack.c.l.b16 %v418
        %v857 = vunpack.c.h.b16 %v418
        %v858 = vunpack.c.l.b16 %v419
        %v859 = vunpack.c.h.b16 %v419
        %v860 = vunpack.c.l.b16 %v420
        %v861 = vunpack.c.h.b16 %v420
        %v862 = vunpack.c.l.b16 %v421
        %v863 = vunpack.c.h.b16 %v421
        %v864 = vunpack.c.l.b16 %v422
        %v865 = vunpack.c.h.b16 %v422
        %v866 = vunpack.c.l.b16 %v423
        %v867 = vunpack.c.h.b16 %v423
        %v868 = vunpack.c.l.b16 %v424
        %v869 = vunpack.c.h.b16 %v424
        %v870 = vunpack.c.l.b16 %v425
        %v871 = vunpack.c.h.b16 %v425
        %v872 = vunpack.c.l.b16 %v426
        %v873 = vunpack.c.h.b16 %v426
        %v874 = vunpack.c.l.b16 %v427
        %v875 = vunpack.c.h.b16 %v427
        %v876 = vunpack.c.l.b16 %v428
        %v877 = vunpack.c.h.b16 %v428
        %v878 = vunpack.c.l.b16 %v429
        %v879 = vunpack.c.h.b16 %v429
        %v880 = vunpack.c.l.b16 %v430
        %v881 = vunpack.c.h.b16 %v430
        %v882 = vunpack.c.l.b16 %v431
        %v883 = vunpack.c.h.b16 %v431
        %v884 = vunpack.c.l.b16 %v432
        %v885 = vunpack.c.h.b16 %v432
        %v886 = vunpack.c.l.b16 %v433
        %v887 = vunpack.c.h.b16 %v433
        %v888 = vunpack.c.l.b16 %v434
        %v889 = vunpack.c.h.b16 %v434
        %v890 = vunpack.c.l.b16 %v435
        %v891 = vunpack.c.h.b16 %v435
        %v892 = vunpack.c.l.b16 %v436
        %v893 = vunpack.c.h.b16 %v436
        %v894 = vunpack.c.l.b16 %v437
        %v895 = vunpack.c.h.b16 %v437
        %v896 = vunpack.c.l.b16 %v438
        %v897 = vunpack.c.h.b16 %v438
        %v898 = vunpack.c.l.b16 %v439
        %v899 = vunpack.c.h.b16 %v439
        %v900 = vunpack.c.l.b16 %v440
        %v901 = vunpack.c.h.b16 %v440
        %v902 = vunpack.c.l.b16 %v441
        %v903 = vunpack.c.h.b16 %v441
        %v904 = vunpack.c.l.b16 %v442
        %v905 = vunpack.c.h.b16 %v442
        %v906 = vunpack.c.l.b16 %v443
        %v907 = vunpack.c.h.b16 %v443
        %v908 = vunpack.c.l.b16 %v444
        %v909 = vunpack.c.h.b16 %v444
        %v910 = vunpack.c.l.b16 %v445
        %v911 = vunpack.c.h.b16 %v445
        %v912 = vunpack.c.l.b16 %v446
        %v913 = vunpack.c.h.b16 %v446
        %v914 = vunpack.c.l.b16 %v447
        %v915 = vunpack.c.h.b16 %v447
        %v916 = vunpack.c.l.b16 %v448
        %v917 = vunpack.c.h.b16 %v448
        %v918 = vunpack.c.l.b16 %v449
        %v919 = vunpack.c.h.b16 %v449
        %v920 = vunpack.c.l.b16 %v450
        %v921 = vunpack.c.h.b16 %v450
        %v922 = vunpack.c.l.b16 %v451
        %v923 = vunpack.c.h.b16 %v451
        %v924 = vunpack.c.l.b16 %v452
        %v925 = vunpack.c.h.b16 %v452
        %v926 = vunpack.c.l.b16 %v453
        %v927 = vunpack.c.h.b16 %v453
        %v928 = vunpack.c.l.b16 %v454
        %v929 = vunpack.c.h.b16 %v454
        %v930 = vunpack.c.l.b16 %v455
        %v931 = vunpack.c.h.b16 %v455
        %v932 = vunpack.c.l.b16 %v456
        %v933 = vunpack.c.h.b16 %v456
        %v934 = vunpack.c.l.b16 %v457
        %v935 = vunpack.c.h.b16 %v457
        %v936 = vunpack.c.l.b16 %v458
        %v937 = vunpack.c.h.b16 %v458
        %v938 = vunpack.c.l.b16 %v459
        %v939 = vunpack.c.h.b16 %v459
        %v940 = vunpack.c.l.b16 %v460
        %v941 = vunpack.c.h.b16 %v460
        %v942 = vunpack.c.l.b16 %v461
        %v943 = vunpack.c.h.b16 %v461
        %v944 = vunpack.c.l.b16 %v462
        %v945 = vunpack.c.h.b16 %v462
        %v946 = vunpack.c.l.b16 %v463
        %v947 = vunpack.c.h.b16 %v463
        %v948 = vunpack.c.l.b16 %v464
        %v949 = vunpack.c.h.b16 %v464
        %v950 = vunpack.c.l.b16 %v465
        %v951 = vunpack.c.h.b16 %v465
        %v952 = vunpack.c.l.b16 %v466
        %v953 = vunpack.c.h.b16 %v466
        %v954 = vunpack.c.l.b16 %v467
        %v955 = vunpack.c.h.b16 %v467
        %v956 = vunpack.c.l.b16 %v468
        %v957 = vunpack.c.h.b16 %v468
        %v958 = vunpack.c.l.b16 %v469
        %v959 = vunpack.c.h.b16 %v469
        %v960 = vunpack.c.l.b16 %v470
        %v961 = vunpack.c.h.b16 %v470
        %v962 = vunpack.c.l.b16 %v471
        %v963 = vunpack.c.h.b16 %v471
        %v964 = vunpack.c.l.b16 %v472
        %v965 = vunpack.c.h.b16 %v472
        %v966 = vunpack.c.l.b16 %v473
        %v967 = vunpack.c.h.b16 %v473
        %v968 = vunpack.c.l.b16 %v474
        %v969 = vunpack.c.h.b16 %v474
        %v970 = vunpack.c.l.b16 %v475
        %v971 = vunpack.c.h.b16 %v475
        %v972 = vunpack.c.l.b16 %v476
        %v973 = vunpack.c.h.b16 %v476
        %v974 = vunpack.c.l.b16 %v477
        %v975 = vunpack.c.h.b16 %v477
        %v976 = vunpack.c.l.b16 %v478
        %v977 = vunpack.c.h.b16 %v478
        %v978 = vunpack.c.l.b16 %v479
        %v979 = vunpack.c.h.b16 %v479
        %v980 = vunpack.c.l.b16 %v480
        %v981 = vunpack.c.h.b16 %v480
        %v982 = vunpack.c.l.b16 %v481
        %v983 = vunpack.c.h.b16 %v481
        %v984 = vunpack.c.l.b16 %v482
        %v985 = vunpack.c.h.b16 %v482
        %v986 = vunpack.c.l.b16 %v483
        %v987 = vunpack.c.h.b16 %v483
        %v988 = vunpack.c.l.b16 %v484
        %v989 = vunpack.c.h.b16 %v484
        %v990 = vunpack.c.l.b16 %v485
        %v991 = vunpack.c.h.b16 %v485
        %v992 = vunpack.c.l.b16 %v486
        %v993 = vunpack.c.h.b16 %v486
        %v994 = vunpack.c.l.b16 %v487
        %v995 = vunpack.c.h.b16 %v487
        %v996 = vunpack.c.l.b16 %v488
        %v997 = vunpack.c.h.b16 %v488
        %v998 = vunpack.c.l.b16 %v489
        %v999 = vunpack.c.h.b16 %v489
        %v1000 = vunpack.c.l.b16 %v490
        %v1001 = vunpack.c.h.b16 %v490
        %v1002 = vunpack.c.l.b16 %v491
        %v1003 = vunpack.c.h.b16 %v491
        %v1004 = vunpack.c.l.b16 %v492
        %v1005 = vunpack.c.h.b16 %v492
        %v1006 = vunpack.c.l.b16 %v493
        %v1007 = vunpack.c.h.b16 %v493
        %v1008 = vunpack.c.l.b16 %v494
        %v1009 = vunpack.c.h.b16 %v494
        %v1010 = vunpack.c.l.b16 %v495
        %v1011 = vunpack.c.h.b16 %v495
        %v1012 = vunpack.c.l.b16 %v496
        %v1013 = vunpack.c.h.b16 %v496
        %v1014 = vunpack.c.l.b16 %v497
        %v1015 = vunpack.c.h.b16 %v497
        %v1016 = vunpack.c.l.b16 %v498
        %v1017 = vunpack.c.h.b16 %v498
        %v1018 = vunpack.c.l.b16 %v499
        %v1019 = vunpack.c.h.b16 %v499
        %v1020 = vunpack.c.l.b16 %v500
        %v1021 = vunpack.c.h.b16 %v500
        %v1022 = vunpack.c.l.b16 %v501
        %v1023 = vunpack.c.h.b16 %v501
        %v1024 = vunpack.c.l.b16 %v502
        %v1025 = vunpack.c.h.b16 %v502
        %v1026 = vunpack.c.l.b16 %v503
        %v1027 = vunpack.c.h.b16 %v503
        %v1028 = vunpack.c.l.b16 %v504
        %v1029 = vunpack.c.h.b16 %v504
        %v1030 = vunpack.c.l.b16 %v505
        %v1031 = vunpack.c.h.b16 %v505
        %v1032 = vunpack.c.l.b16 %v506
        %v1033 = vunpack.c.h.b16 %v506
        %v1034 = vunpack.c.l.b16 %v507
        %v1035 = vunpack.c.h.b16 %v507
        %v1036 = vunpack.c.l.b16 %v508
        %v1037 = vunpack.c.h.b16 %v508
        %v1038 = vunpack.c.l.b16 %v509
        %v1039 = vunpack.c.h.b16 %v509
        %v1040 = vunpack.c.l.b16 %v510
        %v1041 = vunpack.c.h.b16 %v510
        %v1042 = vunpack.c.l.b16 %v511
        %v1043 = vunpack.c.h.b16 %v511
        %v1044 = vunpack.c.l.b16 %v512
        %v1045 = vunpack.c.h.b16 %v512
        %v1046 = vunpack.c.l.b16 %v513
        %v1047 = vunpack.c.h.b16 %v513
        %v1048 = vunpack.c.l.b16 %v514
        %v1049 = vunpack.c.h.b16 %v514
        %v1050 = vunpack.c.l.b16 %v515
        %v1051 = vunpack.c.h.b16 %v515
        %v1052 = vunpack.c.l.b16 %v516
        %v1053 = vunpack.c.h.b16 %v516
        %v1054 = vunpack.c.l.b16 %v517
        %v1055 = vunpack.c.h.b16 %v517
        %v1056 = vunpack.c.l.b16 %v518
        %v1057 = vunpack.c.h.b16 %v518
        %v1058 = vunpack.c.l.b16 %v519
        %v1059 = vunpack.c.h.b16 %v519
        %v1060 = vunpack.c.l.b16 %v520
        %v1061 = vunpack.c.h.b16 %v520
        %v1062 = vunpack.c.l.b16 %v521
        %v1063 = vunpack.c.h.b16 %v521
        %v1064 = vunpack.c.l.b16 %v522
        %v1065 = vunpack.c.h.b16 %v522
        %v1066 = vunpack.c.l.b16 %v523
        %v1067 = vunpack.c.h.b16 %v523
        %v1068 = vunpack.c.l.b16 %v524
        %v1069 = vunpack.c.h.b16 %v524
        %v1070 = vunpack.c.l.b16 %v525
        %v1071 = vunpack.c.h.b16 %v525
        %v1072 = vunpack.c.l.b16 %v526
        %v1073 = vunpack.c.h.b16 %v526
        %v1074 = vunpack.c.l.b16 %v527
        %v1075 = vunpack.c.h.b16 %v527
        %v1076 = vunpack.c.l.b16 %v528
        %v1077 = vunpack.c.h.b16 %v528
        %v1078 = vunpack.c.l.b16 %v529
        %v1079 = vunpack.c.h.b16 %v529
        %v1080 = vunpack.c.l.b16 %v530
        %v1081 = vunpack.c.h.b16 %v530
        %v1082 = vunpack.c.l.b16 %v531
        %v1083 = vunpack.c.h.b16 %v531
        %v1084 = vunpack.c.l.b16 %v532
        %v1085 = vunpack.c.h.b16 %v532
        %v1086 = vunpack.c.l.b16 %v533
        %v1087 = vunpack.c.h.b16 %v533
        %v1088 = vunpack.c.l.b16 %v534
        %v1089 = vunpack.c.h.b16 %v534
        %v1090 = vunpack.c.l.b16 %v535
        %v1091 = vunpack.c.h.b16 %v535
        %v1092 = vunpack.c.l.b16 %v536
        %v1093 = vunpack.c.h.b16 %v536
        %v1094 = vunpack.c.l.b16 %v537
        %v1095 = vunpack.c.h.b16 %v537
        %v1096 = vunpack.c.l.b16 %v538
        %v1097 = vunpack.c.h.b16 %v538
        %v1098 = vunpack.c.l.b16 %v539
        %v1099 = vunpack.c.h.b16 %v539
        %v1100 = vunpack.c.l.b16 %v540
        %v1101 = vunpack.c.h.b16 %v540
        %v1102 = vunpack.c.l.b16 %v541
        %v1103 = vunpack.c.h.b16 %v541
        %v1104 = vunpack.c.l.b16 %v542
        %v1105 = vunpack.c.h.b16 %v542
        %v1106 = vunpack.c.l.b16 %v543
        %v1107 = vunpack.c.h.b16 %v543
        %v1108 = vunpack.c.l.b16 %v544
        %v1109 = vunpack.c.h.b16 %v544
        %v1110 = vunpack.c.l.b16 %v545
        %v1111 = vunpack.c.h.b16 %v545
        %v1112 = vunpack.c.l.b16 %v546
        %v1113 = vunpack.c.h.b16 %v546
        %v1114 = vunpack.c.l.b16 %v547
        %v1115 = vunpack.c.h.b16 %v547
        %v1116 = vunpack.c.l.b16 %v548
        %v1117 = vunpack.c.h.b16 %v548
        %v1118 = vunpack.c.l.b16 %v549
        %v1119 = vunpack.c.h.b16 %v549
        %v1120 = vunpack.c.l.b16 %v550
        %v1121 = vunpack.c.h.b16 %v550
        %v1122 = vunpack.c.l.b16 %v551
        %v1123 = vunpack.c.h.b16 %v551
        %v1124 = vunpack.c.l.b16 %v552
        %v1125 = vunpack.c.h.b16 %v552
        %v1126 = vunpack.c.l.b16 %v553
        %v1127 = vunpack.c.h.b16 %v553
        %v1128 = vunpack.c.l.b16 %v554
        %v1129 = vunpack.c.h.b16 %v554
        %v1130 = vunpack.c.l.b16 %v555
        %v1131 = vunpack.c.h.b16 %v555
        %v1132 = vunpack.c.l.b16 %v556
        %v1133 = vunpack.c.h.b16 %v556
        %v1134 = vunpack.c.l.b16 %v557
        %v1135 = vunpack.c.h.b16 %v557
        %v1136 = vunpack.c.l.b16 %v558
        %v1137 = vunpack.c.h.b16 %v558
        %v1138 = vunpack.c.l.b16 %v559
        %v1139 = vunpack.c.h.b16 %v559
        %v1140 = vunpack.c.l.b16 %v560
        %v1141 = vunpack.c.h.b16 %v560
        %v1142 = vunpack.c.l.b16 %v561
        %v1143 = vunpack.c.h.b16 %v561
        %v1144 = vunpack.c.l.b16 %v562
        %v1145 = vunpack.c.h.b16 %v562
        %v1146 = vunpack.c.l.b16 %v563
        %v1147 = vunpack.c.h.b16 %v563
        %v1148 = vunpack.c.l.b16 %v564
        %v1149 = vunpack.c.h.b16 %v564
        %v1150 = vunpack.c.l.b16 %v565
        %v1151 = vunpack.c.h.b16 %v565
        %v1152 = vunpack.c.l.b16 %v566
        %v1153 = vunpack.c.h.b16 %v566
        %v1154 = vunpack.c.l.b16 %v567
        %v1155 = vunpack.c.h.b16 %v567
        %v1156 = vunpack.c.l.b16 %v568
        %v1157 = vunpack.c.h.b16 %v568
        %v1158 = vunpack.c.l.b16 %v569
        %v1159 = vunpack.c.h.b16 %v569
        %v1160 = vunpack.c.l.b16 %v570
        %v1161 = vunpack.c.h.b16 %v570
        %v1162 = vunpack.c.l.b16 %v571
        %v1163 = vunpack.c.h.b16 %v571
        %v1164 = vunpack.c.l.b16 %v572
        %v1165 = vunpack.c.h.b16 %v572
        %v1166 = vunpack.c.l.b16 %v573
        %v1167 = vunpack.c.h.b16 %v573
        %v1168 = vunpack.c.l.b16 %v574
        %v1169 = vunpack.c.h.b16 %v574
        %v1170 = vunpack.c.l.b16 %v575
        %v1171 = vunpack.c.h.b16 %v575
        %v1172 = vunpack.c.l.b16 %v576
        %v1173 = vunpack.c.h.b16 %v576
        %v1174 = vunpack.c.l.b16 %v577
        %v1175 = vunpack.c.h.b16 %v577
        %v1176 = vunpack.c.l.b16 %v578
        %v1177 = vunpack.c.h.b16 %v578
        %v1178 = vunpack.c.l.b16 %v579
        %v1179 = vunpack.c.h.b16 %v579
        %v1180 = vunpack.c.l.b16 %v580
        %v1181 = vunpack.c.h.b16 %v580
        %v1182 = vunpack.c.l.b16 %v581
        %v1183 = vunpack.c.h.b16 %v581
        %v1184 = vunpack.c.l.b16 %v582
        %v1185 = vunpack.c.h.b16 %v582
        %v1186 = vunpack.c.l.b16 %v583
        %v1187 = vunpack.c.h.b16 %v583
        %v1188 = vunpack.c.l.b16 %v584
        %v1189 = vunpack.c.h.b16 %v584
        %v1190 = vunpack.c.l.b16 %v585
        %v1191 = vunpack.c.h.b16 %v585
        %v1192 = vunpack.c.l.b16 %v586
        %v1193 = vunpack.c.h.b16 %v586
        %v1194 = vunpack.c.l.b16 %v587
        %v1195 = vunpack.c.h.b16 %v587
        %v1196 = vunpack.c.l.b16 %v588
        %v1197 = vunpack.c.h.b16 %v588
        %v1198 = vunpack.c.l.b16 %v589
        %v1199 = vunpack.c.h.b16 %v589
        %v1200 = vunpack.c.l.b16 %v590
        %v1201 = vunpack.c.h.b16 %v590
        %v1202 = vunpack.c.l.b16 %v591
        %v1203 = vunpack.c.h.b16 %v591
        %v1204 = vunpack.c.l.b16 %v592
        %v1205 = vunpack.c.h.b16 %v592
        %v1206 = vunpack.c.l.b16 %v593
        %v1207 = vunpack.c.h.b16 %v593
        %v1208 = vunpack.c.l.b16 %v594
        %v1209 = vunpack.c.h.b16 %v594
        %v1210 = vunpack.c.l.b16 %v595
        %v1211 = vunpack.c.h.b16 %v595
        %v1212 = vunpack.c.l.b16 %v596
        %v1213 = vunpack.c.h.b16 %v596
        %v1214 = vunpack.c.l.b16 %v597
        %v1215 = vunpack.c.h.b16 %v597
        %v1216 = vunpack.c.l.b16 %v598
        %v1217 = vunpack.c.h.b16 %v598
        %v1218 = vunpack.c.l.b16 %v599
        %v1219 = vunpack.c.h.b16 %v599
        %v1220 = vunpack.c.l.b16 %v600
        %v1221 = vunpack.c.h.b16 %v600
        %v1222 = vunpack.c.l.b16 %v601
        %v1223 = vunpack.c.h.b16 %v601
        %v1224 = vunpack.c.l.b16 %v602
        %v1225 = vunpack.c.h.b16 %v602
        %v1226 = vunpack.c.l.b16 %v603
        %v1227 = vunpack.c.h.b16 %v603
        %v1228 = vunpack.c.l.b16 %v604
        %v1229 = vunpack.c.h.b16 %v604
        %v1230 = vunpack.c.l.b16 %v605
        %v1231 = vunpack.c.h.b16 %v605
        %v1232 = vunpack.c.l.b16 %v606
        %v1233 = vunpack.c.h.b16 %v606
        %v1234 = vunpack.c.l.b16 %v607
        %v1235 = vunpack.c.h.b16 %v607
        %v1236 = vunpack.c.l.b16 %v608
        %v1237 = vunpack.c.h.b16 %v608
        %v1238 = vunpack.c.l.b16 %v609
        %v1239 = vunpack.c.h.b16 %v609
        %v1240 = vunpack.c.l.b16 %v610
        %v1241 = vunpack.c.h.b16 %v610
        %v1242 = vunpack.c.l.b16 %v611
        %v1243 = vunpack.c.h.b16 %v611
        %v1244 = vunpack.c.l.b16 %v612
        %v1245 = vunpack.c.h.b16 %v612
        %v1246 = vunpack.c.l.b16 %v613
        %v1247 = vunpack.c.h.b16 %v613
        %v1248 = vpack.c.b16 %v844, %v840
        %v1249 = vpack.c.b16 %v845, %v841
        %v1250 = vpack.c.b16 %v846, %v842
        %v1251 = vpack.c.b16 %v847, %v843
        %v1252 = vpack.c.b16 %v852, %v848
        %v1253 = vpack.c.b16 %v853, %v849
        %v1254 = vpack.c.b16 %v854, %v850
        %v1255 = vpack.c.b16 %v855, %v851
        %v1256 = vpack.c.b16 %v860, %v856
        %v1257 = vpack.c.b16 %v861, %v857
        %v1258 = vpack.c.b16 %v862, %v858
        %v1259 = vpack.c.b16 %v863, %v859
        %v1260 = vpack.c.b16 %v868, %v864
        %v1261 = vpack.c.b16 %v869, %v865
        %v1262 = vpack.c.b16 %v870, %v866
        %v1263 = vpack.c.b16 %v871, %v867
        %v1264 = vpack.c.b16 %v876, %v872
        %v1265 = vpack.c.b16 %v877, %v873
        %v1266 = vpack.c.b16 %v878, %v874
        %v1267 = vpack.c.b16 %v879, %v875
        %v1268 = vpack.c.b16 %v884, %v880
        %v1269 = vpack.c.b16 %v885, %v881
        %v1270 = vpack.c.b16 %v886, %v882
        %v1271 = vpack.c.b16 %v887, %v883
        %v1272 = vpack.c.b16 %v892, %v888
        %v1273 = vpack.c.b16 %v893, %v889
        %v1274 = vpack.c.b16 %v894, %v890
        %v1275 = vpack.c.b16 %v895, %v891
        %v1276 = vpack.c.b16 %v900, %v896
        %v1277 = vpack.c.b16 %v901, %v897
        %v1278 = vpack.c.b16 %v902, %v898
        %v1279 = vpack.c.b16 %v903, %v899
        %v1280 = vpack.c.b16 %v908, %v904
        %v1281 = vpack.c.b16 %v909, %v905
        %v1282 = vpack.c.b16 %v910, %v906
        %v1283 = vpack.c.b16 %v911, %v907
        %v1284 = vpack.c.b16 %v916, %v912
        %v1285 = vpack.c.b16 %v917, %v913
        %v1286 = vpack.c.b16 %v918, %v914
        %v1287 = vpack.c.b16 %v919, %v915
        %v1288 = vpack.c.b16 %v924, %v920
        %v1289 = vpack.c.b16 %v925, %v921
        %v1290 = vpack.c.b16 %v926, %v922
        %v1291 = vpack.c.b16 %v927, %v923
        %v1292 = vpack.c.b16 %v932, %v928
        %v1293 = vpack.c.b16 %v933, %v929
        %v1294 = vpack.c.b16 %v934, %v930
        %v1295 = vpack.c.b16 %v935, %v931
        %v1296 = vpack.c.b16 %v940, %v936
        %v1297 = vpack.c.b16 %v941, %v937
        %v1298 = vpack.c.b16 %v942, %v938
        %v1299 = vpack.c.b16 %v943, %v939
        %v1300 = vpack.c.b16 %v948, %v944
        %v1301 = vpack.c.b16 %v949, %v945
        %v1302 = vpack.c.b16 %v950, %v946
        %v1303 = vpack.c.b16 %v951, %v947
        %v1304 = vpack.c.b16 %v956, %v952
        %v1305 = vpack.c.b16 %v957, %v953
        %v1306 = vpack.c.b16 %v958, %v954
        %v1307 = vpack.c.b16 %v959, %v955
        %v1308 = vpack.c.b16 %v964, %v960
        %v1309 = vpack.c.b16 %v965, %v961
        %v1310 = vpack.c.b16 %v966, %v962
        %v1311 = vpack.c.b16 %v967, %v963
        %v1312 = vpack.c.b16 %v972, %v968
        %v1313 = vpack.c.b16 %v973, %v969
        %v1314 = vpack.c.b16 %v974, %v970
        %v1315 = vpack.c.b16 %v975, %v971
        %v1316 = vpack.c.b16 %v980, %v976
        %v1317 = vpack.c.b16 %v981, %v977
        %v1318 = vpack.c.b16 %v982, %v978
        %v1319 = vpack.c.b16 %v983, %v979
        %v1320 = vpack.c.b16 %v988, %v984
        %v1321 = vpack.c.b16 %v989, %v985
        %v1322 = vpack.c.b16 %v990, %v986
        %v1323 = vpack.c.b16 %v991, %v987
        %v1324 = vpack.c.b16 %v996, %v992
        %v1325 = vpack.c.b16 %v997, %v993
        %v1326 = vpack.c.b16 %v998, %v994
        %v1327 = vpack.c.b16 %v999, %v995
        %v1328 = vpack.c.b16 %v1004, %v1000
        %v1329 = vpack.c.b16 %v1005, %v1001
        %v1330 = vpack.c.b16 %v1006, %v1002
        %v1331 = vpack.c.b16 %v1007, %v1003
        %v1332 = vpack.c.b16 %v1012, %v1008
        %v1333 = vpack.c.b16 %v1013, %v1009
        %v1334 = vpack.c.b16 %v1014, %v1010
        %v1335 = vpack.c.b16 %v1015, %v1011
        %v1336 = vpack.c.b16 %v1020, %v1016
        %v1337 = vpack.c.b16 %v1021, %v1017
        %v1338 = vpack.c.b16 %v1022, %v1018
        %v1339 = vpack.c.b16 %v1023, %v1019
        %v1340 = vpack.c.b16 %v1028, %v1024
        %v1341 = vpack.c.b16 %v1029, %v1025
        %v1342 = vpack.c.b16 %v1030, %v1026
        %v1343 = vpack.c.b16 %v1031, %v1027
        %v1344 = vpack.c.b16 %v1036, %v1032
        %v1345 = vpack.c.b16 %v1037, %v1033
        %v1346 = vpack.c.b16 %v1038, %v1034
        %v1347 = vpack.c.b16 %v1039, %v1035
        %v1348 = vpack.c.b16 %v1044, %v1040
        %v1349 = vpack.c.b16 %v1045, %v1041
        %v1350 = vpack.c.b16 %v1046, %v1042
        %v1351 = vpack.c.b16 %v1047, %v1043
        %v1352 = vpack.c.b16 %v1052, %v1048
        %v1353 = vpack.c.b16 %v1053, %v1049
        %v1354 = vpack.c.b16 %v1054, %v1050
        %v1355 = vpack.c.b16 %v1055, %v1051
        %v1356 = vpack.c.b16 %v1060, %v1056
        %v1357 = vpack.c.b16 %v1061, %v1057
        %v1358 = vpack.c.b16 %v1062, %v1058
        %v1359 = vpack.c.b16 %v1063, %v1059
        %v1360 = vpack.c.b16 %v1068, %v1064
        %v1361 = vpack.c.b16 %v1069, %v1065
        %v1362 = vpack.c.b16 %v1070, %v1066
        %v1363 = vpack.c.b16 %v1071, %v1067
        %v1364 = vpack.c.b16 %v1076, %v1072
        %v1365 = vpack.c.b16 %v1077, %v1073
        %v1366 = vpack.c.b16 %v1078, %v1074
        %v1367 = vpack.c.b16 %v1079, %v1075
        %v1368 = vpack.c.b16 %v1084, %v1080
        %v1369 = vpack.c.b16 %v1085, %v1081
        %v1370 = vpack.c.b16 %v1086, %v1082
        %v1371 = vpack.c.b16 %v1087, %v1083
        %v1372 = vpack.c.b16 %v1092, %v1088
        %v1373 = vpack.c.b16 %v1093, %v1089
        %v1374 = vpack.c.b16 %v1094, %v1090
        %v1375 = vpack.c.b16 %v1095, %v1091
        %v1376 = vpack.c.b16 %v1100, %v1096
        %v1377 = vpack.c.b16 %v1101, %v1097
        %v1378 = vpack.c.b16 %v1102, %v1098
        %v1379 = vpack.c.b16 %v1103, %v1099
        %v1380 = vpack.c.b16 %v1108, %v1104
        %v1381 = vpack.c.b16 %v1109, %v1105
        %v1382 = vpack.c.b16 %v1110, %v1106
        %v1383 = vpack.c.b16 %v1111, %v1107
        %v1384 = vpack.c.b16 %v1116, %v1112
        %v1385 = vpack.c.b16 %v1117, %v1113
        %v1386 = vpack.c.b16 %v1118, %v1114
        %v1387 = vpack.c.b16 %v1119, %v1115
        %v1388 = vpack.c.b16 %v1124, %v1120
        %v1389 = vpack.c.b16 %v1125, %v1121
        %v1390 = vpack.c.b16 %v1126, %v1122
        %v1391 = vpack.c.b16 %v1127, %v1123
        %v1392 = vpack.c.b16 %v1132, %v1128
        %v1393 = vpack.c.b16 %v1133, %v1129
        %v1394 = vpack.c.b16 %v1134, %v1130
        %v1395 = vpack.c.b16 %v1135, %v1131
        %v1396 = vpack.c.b16 %v1140, %v1136
        %v1397 = vpack.c.b16 %v1141, %v1137
        %v1398 = vpack.c.b16 %v1142, %v1138
        %v1399 = vpack.c.b16 %v1143, %v1139
        %v1400 = vpack.c.b16 %v1148, %v1144
        %v1401 = vpack.c.b16 %v1149, %v1145
        %v1402 = vpack.c.b16 %v1150, %v1146
        %v1403 = vpack.c.b16 %v1151, %v1147
        %v1404 = vpack.c.b16 %v1156, %v1152
        %v1405 = vpack.c.b16 %v1157, %v1153
        %v1406 = vpack.c.b16 %v1158, %v1154
        %v1407 = vpack.c.b16 %v1159, %v1155
        %v1408 = vpack.c.b16 %v1164, %v1160
        %v1409 = vpack.c.b16 %v1165, %v1161
        %v1410 = vpack.c.b16 %v1166, %v1162
        %v1411 = vpack.c.b16 %v1167, %v1163
        %v1412 = vpack.c.b16 %v1172, %v1168
        %v1413 = vpack.c.b16 %v1173, %v1169
        %v1414 = vpack.c.b16 %v1174, %v1170
        %v1415 = vpack.c.b16 %v1175, %v1171
        %v1416 = vpack.c.b16 %v1180, %v1176
        %v1417 = vpack.c.b16 %v1181, %v1177
        %v1418 = vpack.c.b16 %v1182, %v1178
        %v1419 = vpack.c.b16 %v1183, %v1179
        %v1420 = vpack.c.b16 %v1188, %v1184
        %v1421 = vpack.c.b16 %v1189, %v1185
        %v1422 = vpack.c.b16 %v1190, %v1186
        %v1423 = vpack.c.b16 %v1191, %v1187
        %v1424 = vpack.c.b16 %v1196, %v1192
        %v1425 = vpack.c.b16 %v1197, %v1193
        %v1426 = vpack.c.b16 %v1198, %v1194
        %v1427 = vpack.c.b16 %v1199, %v1195
        %v1428 = vpack.c.b16 %v1204, %v1200
        %v1429 = vpack.c.b16 %v1205, %v1201
        %v1430 = vpack.c.b16 %v1206, %v1202
        %v1431 = vpack.c.b16 %v1207, %v1203
        %v1432 = vpack.c.b16 %v1212, %v1208
        %v1433 = vpack.c.b16 %v1213, %v1209
        %v1434 = vpack.c.b16 %v1214, %v1210
        %v1435 = vpack.c.b16 %v1215, %v1211
        %v1436 = vpack.c.b16 %v1220, %v1216
        %v1437 = vpack.c.b16 %v1221, %v1217
        %v1438 = vpack.c.b16 %v1222, %v1218
        %v1439 = vpack.c.b16 %v1223, %v1219
        %v1440 = vpack.c.b16 %v1228, %v1224
        %v1441 = vpack.c.b16 %v1229, %v1225
        %v1442 = vpack.c.b16 %v1230, %v1226
        %v1443 = vpack.c.b16 %v1231, %v1227
        %v1444 = vpack.c.b16 %v1236, %v1232
        %v1445 = vpack.c.b16 %v1237, %v1233
        %v1446 = vpack.c.b16 %v1238, %v1234
        %v1447 = vpack.c.b16 %v1239, %v1235
        %v1448 = vpack.c.b16 %v1244, %v1240
        %v1449 = vpack.c.b16 %v1245, %v1241
        %v1450 = vpack.c.b16 %v1246, %v1242
        %v1451 = vpack.c.b16 %v1247, %v1243
        %vm1652 = vcmask 367616
        %v1654 = vsel %vm1652, %v409, 0
        %vm1656 = vcmask 1045504
        %vm1657 = vcmask 1046528
        %v1658 = vsel %vm1656, 4294967295, 65535
        %v1659 = vsel %vm1657, %v1658, 0
        %v1661 = vand.u32 %v1448, %v1659
        %v1664 = vand.u32 %v1449, %v1659
        %v1667 = vand.u32 %v1450, %v1659
        %v1670 = vand.u32 %v1451, %v1659
        %1672 = vmatprep.subr.bf16.mxu0 %v1277
        %1673 = vmatpush1.bf16.msra.mxu0 %v1276
        %1674 = vmatprep.subr.bf16.mxu0 %v1273
        %1675 = vmatpush1.bf16.msra.mxu0 %v1272
        %1676 = vmatprep.subr.bf16.mxu0 %v1269
        %1677 = vmatpush1.bf16.msra.mxu0 %v1268
        %1678 = vmatprep.subr.bf16.mxu0 %v1265
        %1679 = vmatpush1.bf16.msra.mxu0 %v1264
        %1680 = vmatprep.subr.bf16.mxu0 %v1261
        %1681 = vmatpush1.bf16.msra.mxu0 %v1260
        %1682 = vmatprep.subr.bf16.mxu0 %v1257
        %1683 = vmatpush1.bf16.msra.mxu0 %v1256
        %1684 = vmatprep.subr.bf16.mxu0 %v1253
        %1685 = vmatpush1.bf16.msra.mxu0 %v1252
        %1686 = vmatprep.subr.bf16.mxu0 %v1249
        %1687 = vmatpush1.bf16.msra.mxu0 %v1248
        %1688 = vmatprep.subr.bf16.mxu0 %v1309
        %1689 = vmatpush2.bf16.msra.mxu0 %v1308
        %1690 = vmatprep.subr.bf16.mxu0 %v1305
        %1691 = vmatpush2.bf16.msra.mxu0 %v1304
        %1692 = vmatprep.subr.bf16.mxu0 %v1301
        %1693 = vmatpush2.bf16.msra.mxu0 %v1300
        %1694 = vmatprep.subr.bf16.mxu0 %v1297
        %1695 = vmatpush2.bf16.msra.mxu0 %v1296
        %1696 = vmatprep.subr.bf16.mxu0 %v1293
        %1697 = vmatpush2.bf16.msra.mxu0 %v1292
        %1698 = vmatprep.subr.bf16.mxu0 %v1289
        %1699 = vmatpush2.bf16.msra.mxu0 %v1288
        %1700 = vmatprep.subr.bf16.mxu0 %v1285
        %1701 = vmatpush2.bf16.msra.mxu0 %v1284
        %1702 = vmatprep.subr.bf16.mxu0 %v1281
        %1703 = vmatpush2.bf16.msra.mxu0 %v1280
        %1704 = vmatprep.mubr.bf16.mxu0 %v404
        %1705 = vmatmul.mubr.bf16.gmra.mxu0 %v403
        %v1706 = vpop.f32.mrf.mxu0
        %v1707 = vadd.f32 %v619, %v1706
        %v1708 = vpop.f32.mrf.mxu0
        %v1709 = vadd.f32 %v623, %v1708
        %v1710 = vpop.f32.mrf.mxu0
        %v1711 = vpop.f32.mrf.mxu0
        %1712 = vdwg.mxu0
        %1713 = vmatprep.subr.bf16.mxu0 %v1341
        %1714 = vmatpush1.bf16.msra.mxu0 %v1340
        %1715 = vmatprep.subr.bf16.mxu0 %v1337
        %1716 = vmatpush1.bf16.msra.mxu0 %v1336
        %1717 = vmatprep.subr.bf16.mxu0 %v1333
        %1718 = vmatpush1.bf16.msra.mxu0 %v1332
        %1719 = vmatprep.subr.bf16.mxu0 %v1329
        %1720 = vmatpush1.bf16.msra.mxu0 %v1328
        %1721 = vmatprep.subr.bf16.mxu0 %v1325
        %1722 = vmatpush1.bf16.msra.mxu0 %v1324
        %1723 = vmatprep.subr.bf16.mxu0 %v1321
        %1724 = vmatpush1.bf16.msra.mxu0 %v1320
        %1725 = vmatprep.subr.bf16.mxu0 %v1317
        %1726 = vmatpush1.bf16.msra.mxu0 %v1316
        %1727 = vmatprep.subr.bf16.mxu0 %v1313
        %1728 = vmatpush1.bf16.msra.mxu0 %v1312
        %1729 = vmatprep.subr.bf16.mxu0 %v1373
        %1730 = vmatpush2.bf16.msra.mxu0 %v1372
        %1731 = vmatprep.subr.bf16.mxu0 %v1369
        %1732 = vmatpush2.bf16.msra.mxu0 %v1368
        %1733 = vmatprep.subr.bf16.mxu0 %v1365
        %1734 = vmatpush2.bf16.msra.mxu0 %v1364
        %1735 = vmatprep.subr.bf16.mxu0 %v1361
        %1736 = vmatpush2.bf16.msra.mxu0 %v1360
        %1737 = vmatprep.subr.bf16.mxu0 %v1357
        %1738 = vmatpush2.bf16.msra.mxu0 %v1356
        %1739 = vmatprep.subr.bf16.mxu0 %v1353
        %1740 = vmatpush2.bf16.msra.mxu0 %v1352
        %1741 = vmatprep.subr.bf16.mxu0 %v1349
        %1742 = vmatpush2.bf16.msra.mxu0 %v1348
        %1743 = vmatprep.subr.bf16.mxu0 %v1345
        %1744 = vmatpush2.bf16.msra.mxu0 %v1344
        %1745 = vmatprep.mubr.bf16.mxu0 %v406
        %1746 = vmatmul.mubr.bf16.gmra.mxu0 %v405
        %v1747 = vpop.f32.mrf.mxu0
        %v1748 = vadd.f32 %v1707, %v1747
        %v1749 = vpop.f32.mrf.mxu0
        %v1750 = vadd.f32 %v1709, %v1749
        %v1751 = vpop.f32.mrf.mxu0
        %v1752 = vpop.f32.mrf.mxu0
        %1753 = vdwg.mxu0
        %1754 = vmatprep.subr.bf16.mxu0 %v1405
        %1755 = vmatpush1.bf16.msra.mxu0 %v1404
        %1756 = vmatprep.subr.bf16.mxu0 %v1401
        %1757 = vmatpush1.bf16.msra.mxu0 %v1400
        %1758 = vmatprep.subr.bf16.mxu0 %v1397
        %1759 = vmatpush1.bf16.msra.mxu0 %v1396
        %1760 = vmatprep.subr.bf16.mxu0 %v1393
        %1761 = vmatpush1.bf16.msra.mxu0 %v1392
        %1762 = vmatprep.subr.bf16.mxu0 %v1389
        %1763 = vmatpush1.bf16.msra.mxu0 %v1388
        %1764 = vmatprep.subr.bf16.mxu0 %v1385
        %1765 = vmatpush1.bf16.msra.mxu0 %v1384
        %1766 = vmatprep.subr.bf16.mxu0 %v1381
        %1767 = vmatpush1.bf16.msra.mxu0 %v1380
        %1768 = vmatprep.subr.bf16.mxu0 %v1377
        %1769 = vmatpush1.bf16.msra.mxu0 %v1376
        %1770 = vmatprep.subr.bf16.mxu0 %v1437
        %1771 = vmatpush2.bf16.msra.mxu0 %v1436
        %1772 = vmatprep.subr.bf16.mxu0 %v1433
        %1773 = vmatpush2.bf16.msra.mxu0 %v1432
        %1774 = vmatprep.subr.bf16.mxu0 %v1429
        %1775 = vmatpush2.bf16.msra.mxu0 %v1428
        %1776 = vmatprep.subr.bf16.mxu0 %v1425
        %1777 = vmatpush2.bf16.msra.mxu0 %v1424
        %1778 = vmatprep.subr.bf16.mxu0 %v1421
        %1779 = vmatpush2.bf16.msra.mxu0 %v1420
        %1780 = vmatprep.subr.bf16.mxu0 %v1417
        %1781 = vmatpush2.bf16.msra.mxu0 %v1416
        %1782 = vmatprep.subr.bf16.mxu0 %v1413
        %1783 = vmatpush2.bf16.msra.mxu0 %v1412
        %1784 = vmatprep.subr.bf16.mxu0 %v1409
        %1785 = vmatpush2.bf16.msra.mxu0 %v1408
        %1786 = vmatprep.mubr.bf16.mxu0 %v408
        %1787 = vmatmul.mubr.bf16.gmra.mxu0 %v407
        %v1788 = vpop.f32.mrf.mxu0
        %v1789 = vadd.f32 %v1748, %v1788
        %v1790 = vpop.f32.mrf.mxu0
        %v1791 = vadd.f32 %v1750, %v1790
        %v1792 = vpop.f32.mrf.mxu0
        %v1793 = vpop.f32.mrf.mxu0
        %1794 = vdwg.mxu0
        %1795 = vmatprep.subr.bf16.mxu0 0
        %1796 = vmatpush1.bf16.msra.mxu0 0
        %1797 = vmatprep.subr.bf16.mxu0 0
        %1798 = vmatpush1.bf16.msra.mxu0 0
        %1799 = vmatprep.subr.bf16.mxu0 0
        %1800 = vmatpush1.bf16.msra.mxu0 0
        %1801 = vmatprep.subr.bf16.mxu0 0
        %1802 = vmatpush1.bf16.msra.mxu0 0
        %1803 = vmatprep.subr.bf16.mxu0 0
        %1804 = vmatpush1.bf16.msra.mxu0 0
        %1805 = vmatprep.subr.bf16.mxu0 %v1664
        %1806 = vmatpush1.bf16.msra.mxu0 %v1661
        %1807 = vmatprep.subr.bf16.mxu0 %v1445
        %1808 = vmatpush1.bf16.msra.mxu0 %v1444
        %1809 = vmatprep.subr.bf16.mxu0 %v1441
        %1810 = vmatpush1.bf16.msra.mxu0 %v1440
        %1811 = vmatprep.subr.bf16.mxu0 0
        %1812 = vmatpush2.bf16.msra.mxu0 0
        %1813 = vmatprep.subr.bf16.mxu0 0
        %1814 = vmatpush2.bf16.msra.mxu0 0
        %1815 = vmatprep.subr.bf16.mxu0 0
        %1816 = vmatpush2.bf16.msra.mxu0 0
        %1817 = vmatprep.subr.bf16.mxu0 0
        %1818 = vmatpush2.bf16.msra.mxu0 0
        %1819 = vmatprep.subr.bf16.mxu0 0
        %1820 = vmatpush2.bf16.msra.mxu0 0
        %1821 = vmatprep.subr.bf16.mxu0 0
        %1822 = vmatpush2.bf16.msra.mxu0 0
        %1823 = vmatprep.subr.bf16.mxu0 0
        %1824 = vmatpush2.bf16.msra.mxu0 0
        %1825 = vmatprep.subr.bf16.mxu0 0
        %1826 = vmatpush2.bf16.msra.mxu0 0
        %1827 = vmatprep.mubr.bf16.mxu0 0
        %1828 = vmatmul.mubr.bf16.gmra.mxu0 %v1654
        %v1829 = vpop.f32.mrf.mxu0
        %v1830 = vadd.f32 %v1789, %v1829
        %v1831 = vpop.f32.mrf.mxu0
        %v1832 = vadd.f32 %v1791, %v1831
        %v1833 = vpop.f32.mrf.mxu0
        %v1834 = vpop.f32.mrf.mxu0
        %1835 = vdwg.mxu0
        %1836 = vmatprep.subr.bf16.mxu0 %v1279
        %1837 = vmatpush1.bf16.msra.mxu0 %v1278
        %1838 = vmatprep.subr.bf16.mxu0 %v1275
        %1839 = vmatpush1.bf16.msra.mxu0 %v1274
        %1840 = vmatprep.subr.bf16.mxu0 %v1271
        %1841 = vmatpush1.bf16.msra.mxu0 %v1270
        %1842 = vmatprep.subr.bf16.mxu0 %v1267
        %1843 = vmatpush1.bf16.msra.mxu0 %v1266
        %1844 = vmatprep.subr.bf16.mxu0 %v1263
        %1845 = vmatpush1.bf16.msra.mxu0 %v1262
        %1846 = vmatprep.subr.bf16.mxu0 %v1259
        %1847 = vmatpush1.bf16.msra.mxu0 %v1258
        %1848 = vmatprep.subr.bf16.mxu0 %v1255
        %1849 = vmatpush1.bf16.msra.mxu0 %v1254
        %1850 = vmatprep.subr.bf16.mxu0 %v1251
        %1851 = vmatpush1.bf16.msra.mxu0 %v1250
        %1852 = vmatprep.subr.bf16.mxu0 %v1311
        %1853 = vmatpush2.bf16.msra.mxu0 %v1310
        %1854 = vmatprep.subr.bf16.mxu0 %v1307
        %1855 = vmatpush2.bf16.msra.mxu0 %v1306
        %1856 = vmatprep.subr.bf16.mxu0 %v1303
        %1857 = vmatpush2.bf16.msra.mxu0 %v1302
        %1858 = vmatprep.subr.bf16.mxu0 %v1299
        %1859 = vmatpush2.bf16.msra.mxu0 %v1298
        %1860 = vmatprep.subr.bf16.mxu0 %v1295
        %1861 = vmatpush2.bf16.msra.mxu0 %v1294
        %1862 = vmatprep.subr.bf16.mxu0 %v1291
        %1863 = vmatpush2.bf16.msra.mxu0 %v1290
        %1864 = vmatprep.subr.bf16.mxu0 %v1287
        %1865 = vmatpush2.bf16.msra.mxu0 %v1286
        %1866 = vmatprep.subr.bf16.mxu0 %v1283
        %1867 = vmatpush2.bf16.msra.mxu0 %v1282
        %1868 = vmatprep.mubr.bf16.mxu0 %v404
        %1869 = vmatmul.mubr.bf16.gmra.mxu0 %v403
        %v1870 = vpop.f32.mrf.mxu0
        %v1871 = vadd.f32 %v627, %v1870
        %v1872 = vpop.f32.mrf.mxu0
        %v1873 = vadd.f32 %v631, %v1872
        %v1874 = vpop.f32.mrf.mxu0
        %v1875 = vpop.f32.mrf.mxu0
        %1876 = vdwg.mxu0
        %1877 = vmatprep.subr.bf16.mxu0 %v1343
        %1878 = vmatpush1.bf16.msra.mxu0 %v1342
        %1879 = vmatprep.subr.bf16.mxu0 %v1339
        %1880 = vmatpush1.bf16.msra.mxu0 %v1338
        %1881 = vmatprep.subr.bf16.mxu0 %v1335
        %1882 = vmatpush1.bf16.msra.mxu0 %v1334
        %1883 = vmatprep.subr.bf16.mxu0 %v1331
        %1884 = vmatpush1.bf16.msra.mxu0 %v1330
        %1885 = vmatprep.subr.bf16.mxu0 %v1327
        %1886 = vmatpush1.bf16.msra.mxu0 %v1326
        %1887 = vmatprep.subr.bf16.mxu0 %v1323
        %1888 = vmatpush1.bf16.msra.mxu0 %v1322
        %1889 = vmatprep.subr.bf16.mxu0 %v1319
        %1890 = vmatpush1.bf16.msra.mxu0 %v1318
        %1891 = vmatprep.subr.bf16.mxu0 %v1315
        %1892 = vmatpush1.bf16.msra.mxu0 %v1314
        %1893 = vmatprep.subr.bf16.mxu0 %v1375
        %1894 = vmatpush2.bf16.msra.mxu0 %v1374
        %1895 = vmatprep.subr.bf16.mxu0 %v1371
        %1896 = vmatpush2.bf16.msra.mxu0 %v1370
        %1897 = vmatprep.subr.bf16.mxu0 %v1367
        %1898 = vmatpush2.bf16.msra.mxu0 %v1366
        %1899 = vmatprep.subr.bf16.mxu0 %v1363
        %1900 = vmatpush2.bf16.msra.mxu0 %v1362
        %1901 = vmatprep.subr.bf16.mxu0 %v1359
        %1902 = vmatpush2.bf16.msra.mxu0 %v1358
        %1903 = vmatprep.subr.bf16.mxu0 %v1355
        %1904 = vmatpush2.bf16.msra.mxu0 %v1354
        %1905 = vmatprep.subr.bf16.mxu0 %v1351
        %1906 = vmatpush2.bf16.msra.mxu0 %v1350
        %1907 = vmatprep.subr.bf16.mxu0 %v1347
        %1908 = vmatpush2.bf16.msra.mxu0 %v1346
        %1909 = vmatprep.mubr.bf16.mxu0 %v406
        %1910 = vmatmul.mubr.bf16.gmra.mxu0 %v405
        %v1911 = vpop.f32.mrf.mxu0
        %v1912 = vadd.f32 %v1871, %v1911
        %v1913 = vpop.f32.mrf.mxu0
        %v1914 = vadd.f32 %v1873, %v1913
        %v1915 = vpop.f32.mrf.mxu0
        %v1916 = vpop.f32.mrf.mxu0
        %1917 = vdwg.mxu0
        %1918 = vmatprep.subr.bf16.mxu0 %v1407
        %1919 = vmatpush1.bf16.msra.mxu0 %v1406
        %1920 = vmatprep.subr.bf16.mxu0 %v1403
        %1921 = vmatpush1.bf16.msra.mxu0 %v1402
        %1922 = vmatprep.subr.bf16.mxu0 %v1399
        %1923 = vmatpush1.bf16.msra.mxu0 %v1398
        %1924 = vmatprep.subr.bf16.mxu0 %v1395
        %1925 = vmatpush1.bf16.msra.mxu0 %v1394
        %1926 = vmatprep.subr.bf16.mxu0 %v1391
        %1927 = vmatpush1.bf16.msra.mxu0 %v1390
        %1928 = vmatprep.subr.bf16.mxu0 %v1387
        %1929 = vmatpush1.bf16.msra.mxu0 %v1386
        %1930 = vmatprep.subr.bf16.mxu0 %v1383
        %1931 = vmatpush1.bf16.msra.mxu0 %v1382
        %1932 = vmatprep.subr.bf16.mxu0 %v1379
        %1933 = vmatpush1.bf16.msra.mxu0 %v1378
        %1934 = vmatprep.subr.bf16.mxu0 %v1439
        %1935 = vmatpush2.bf16.msra.mxu0 %v1438
        %1936 = vmatprep.subr.bf16.mxu0 %v1435
        %1937 = vmatpush2.bf16.msra.mxu0 %v1434
        %1938 = vmatprep.subr.bf16.mxu0 %v1431
        %1939 = vmatpush2.bf16.msra.mxu0 %v1430
        %1940 = vmatprep.subr.bf16.mxu0 %v1427
        %1941 = vmatpush2.bf16.msra.mxu0 %v1426
        %1942 = vmatprep.subr.bf16.mxu0 %v1423
        %1943 = vmatpush2.bf16.msra.mxu0 %v1422
        %1944 = vmatprep.subr.bf16.mxu0 %v1419
        %1945 = vmatpush2.bf16.msra.mxu0 %v1418
        %1946 = vmatprep.subr.bf16.mxu0 %v1415
        %1947 = vmatpush2.bf16.msra.mxu0 %v1414
        %1948 = vmatprep.subr.bf16.mxu0 %v1411
        %1949 = vmatpush2.bf16.msra.mxu0 %v1410
        %1950 = vmatprep.mubr.bf16.mxu0 %v408
        %1951 = vmatmul.mubr.bf16.gmra.mxu0 %v407
        %v1952 = vpop.f32.mrf.mxu0
        %v1953 = vadd.f32 %v1912, %v1952
        %v1954 = vpop.f32.mrf.mxu0
        %v1955 = vadd.f32 %v1914, %v1954
        %v1956 = vpop.f32.mrf.mxu0
        %v1957 = vpop.f32.mrf.mxu0
        %1958 = vdwg.mxu0
        %1959 = vmatprep.subr.bf16.mxu0 0
        %1960 = vmatpush1.bf16.msra.mxu0 0
        %1961 = vmatprep.subr.bf16.mxu0 0
        %1962 = vmatpush1.bf16.msra.mxu0 0
        %1963 = vmatprep.subr.bf16.mxu0 0
        %1964 = vmatpush1.bf16.msra.mxu0 0
        %1965 = vmatprep.subr.bf16.mxu0 0
        %1966 = vmatpush1.bf16.msra.mxu0 0
        %1967 = vmatprep.subr.bf16.mxu0 0
        %1968 = vmatpush1.bf16.msra.mxu0 0
        %1969 = vmatprep.subr.bf16.mxu0 %v1670
        %1970 = vmatpush1.bf16.msra.mxu0 %v1667
        %1971 = vmatprep.subr.bf16.mxu0 %v1447
        %1972 = vmatpush1.bf16.msra.mxu0 %v1446
        %1973 = vmatprep.subr.bf16.mxu0 %v1443
        %1974 = vmatpush1.bf16.msra.mxu0 %v1442
        %1975 = vmatprep.subr.bf16.mxu0 0
        %1976 = vmatpush2.bf16.msra.mxu0 0
        %1977 = vmatprep.subr.bf16.mxu0 0
        %1978 = vmatpush2.bf16.msra.mxu0 0
        %1979 = vmatprep.subr.bf16.mxu0 0
        %1980 = vmatpush2.bf16.msra.mxu0 0
        %1981 = vmatprep.subr.bf16.mxu0 0
        %1982 = vmatpush2.bf16.msra.mxu0 0
        %1983 = vmatprep.subr.bf16.mxu0 0
        %1984 = vmatpush2.bf16.msra.mxu0 0
        %1985 = vmatprep.subr.bf16.mxu0 0
        %1986 = vmatpush2.bf16.msra.mxu0 0
        %1987 = vmatprep.subr.bf16.mxu0 0
        %1988 = vmatpush2.bf16.msra.mxu0 0
        %1989 = vmatprep.subr.bf16.mxu0 0
        %1990 = vmatpush2.bf16.msra.mxu0 0
        %1991 = vmatprep.mubr.bf16.mxu0 0
        %1992 = vmatmul.mubr.bf16.gmra.mxu0 %v1654
        %v1993 = vpop.f32.mrf.mxu0
        %v1994 = vadd.f32 %v1953, %v1993
        %v1995 = vpop.f32.mrf.mxu0
        %v1996 = vadd.f32 %v1955, %v1995
        %v1997 = vpop.f32.mrf.mxu0
        %v1998 = vpop.f32.mrf.mxu0
        %1999 = vdwg.mxu0
        %v2000 = vmax.f32 %v1830, 0.0
        %v2001 = vmax.f32 %v1832, 0.0
        %v2002 = vmax.f32 %v1994, 0.0
        %v2003 = vmax.f32 %v1996, 0.0
        %v2004 = vpack.c.bf16 %v2000, %v2000
        %v2005 = vpack.c.bf16 %v2001, %v2001
        %v2006 = vpack.c.bf16 %v2002, %v2002
        %v2007 = vpack.c.bf16 %v2003, %v2003
        %v2008 = vld [vmem:[#allocation7] sm:$0xff]
        %v2009 = vld [vmem:[#allocation7 + $0x8] sm:$0xff]
        %v2010 = vld [vmem:[#allocation7 + $0x10] sm:$0xff]
        %v2011 = vld [vmem:[#allocation7 + $0x18] sm:$0xff]
        %v2012 = vld [vmem:[#allocation7 + $0x20] sm:$0xff]
        %v2013 = vld [vmem:[#allocation7 + $0x28] sm:$0xff]
        %v2014 = vld [vmem:[#allocation7 + $0x30] sm:$0xff]
        %v2015 = vld [vmem:[#allocation7 + $0x38] sm:$0xff]
        %v2016 = vld [vmem:[#allocation7 + $0x40] sm:$0xff]
        %v2017 = vld [vmem:[#allocation7 + $0x48] sm:$0xff]
        %v2018 = vld [vmem:[#allocation7 + $0x50] sm:$0xff]
        %v2019 = vld [vmem:[#allocation7 + $0x58] sm:$0xff]
        %v2020 = vld [vmem:[#allocation7 + $0x60] sm:$0xff]
        %v2021 = vld [vmem:[#allocation7 + $0x68] sm:$0xff]
        %v2022 = vld [vmem:[#allocation7 + $0x70] sm:$0xff]
        %v2023 = vld [vmem:[#allocation7 + $0x78] sm:$0xff]
        %v2024 = vld [vmem:[#allocation7 + $0x80] sm:$0xff]
        %v2025 = vld [vmem:[#allocation7 + $0x88] sm:$0xff]
        %v2026 = vld [vmem:[#allocation7 + $0x90] sm:$0xff]
        %v2027 = vld [vmem:[#allocation7 + $0x98] sm:$0xff]
        %v2028 = vld [vmem:[#allocation7 + $0xa0] sm:$0xff]
        %v2029 = vld [vmem:[#allocation7 + $0xa8] sm:$0xff]
        %v2030 = vld [vmem:[#allocation7 + $0xb0] sm:$0xff]
        %v2031 = vld [vmem:[#allocation7 + $0xb8] sm:$0xff]
        %v2032 = vld [vmem:[#allocation7 + $0xc0] sm:$0xff]
        %v2033 = vld [vmem:[#allocation7 + $0xc8] sm:$0xff]
        %v2034 = vld [vmem:[#allocation7 + $0xd0] sm:$0xff]
        %v2035 = vld [vmem:[#allocation7 + $0xd8] sm:$0xff]
        %v2036 = vld [vmem:[#allocation7 + $0xe0] sm:$0xff]
        %v2037 = vld [vmem:[#allocation7 + $0xe8] sm:$0xff]
        %v2038 = vld [vmem:[#allocation7 + $0xf0] sm:$0xff]
        %v2039 = vld [vmem:[#allocation7 + $0xf8] sm:$0xff]
        %v2040 = vld [vmem:[#allocation7 + $0x100] sm:$0xff]
        %v2041 = vld [vmem:[#allocation7 + $0x108] sm:$0xff]
        %v2042 = vld [vmem:[#allocation7 + $0x110] sm:$0xff]
        %v2043 = vld [vmem:[#allocation7 + $0x118] sm:$0xff]
        %v2044 = vld [vmem:[#allocation7 + $0x120] sm:$0xff]
        %v2045 = vld [vmem:[#allocation7 + $0x128] sm:$0xff]
        %v2046 = vld [vmem:[#allocation7 + $0x130] sm:$0xff]
        %v2047 = vld [vmem:[#allocation7 + $0x138] sm:$0xff]
        %v2048 = vld [vmem:[#allocation7 + $0x140] sm:$0xff]
        %v2049 = vld [vmem:[#allocation7 + $0x148] sm:$0xff]
        %v2050 = vld [vmem:[#allocation7 + $0x150] sm:$0xff]
        %v2051 = vld [vmem:[#allocation7 + $0x158] sm:$0xff]
        %v2052 = vld [vmem:[#allocation7 + $0x160] sm:$0xff]
        %v2053 = vld [vmem:[#allocation7 + $0x168] sm:$0xff]
        %v2054 = vld [vmem:[#allocation7 + $0x170] sm:$0xff]
        %v2055 = vld [vmem:[#allocation7 + $0x178] sm:$0xff]
        %v2056 = vld [vmem:[#allocation7 + $0x180] sm:$0xff]
        %v2057 = vld [vmem:[#allocation7 + $0x188] sm:$0xff]
        %v2058 = vld [vmem:[#allocation7 + $0x190] sm:$0xff]
        %v2059 = vld [vmem:[#allocation7 + $0x198] sm:$0xff]
        %v2060 = vld [vmem:[#allocation7 + $0x1a0] sm:$0xff]
        %v2061 = vld [vmem:[#allocation7 + $0x1a8] sm:$0xff]
        %v2062 = vld [vmem:[#allocation7 + $0x1b0] sm:$0xff]
        %v2063 = vld [vmem:[#allocation7 + $0x1b8] sm:$0xff]
        %v2064 = vld [vmem:[#allocation7 + $0x1c0] sm:$0xff]
        %v2065 = vld [vmem:[#allocation7 + $0x1c8] sm:$0xff]
        %v2066 = vld [vmem:[#allocation7 + $0x1d0] sm:$0xff]
        %v2067 = vld [vmem:[#allocation7 + $0x1d8] sm:$0xff]
        %v2068 = vld [vmem:[#allocation7 + $0x1e0] sm:$0xff]
        %v2069 = vld [vmem:[#allocation7 + $0x1e8] sm:$0xff]
        %v2070 = vld [vmem:[#allocation7 + $0x1f0] sm:$0xff]
        %v2071 = vld [vmem:[#allocation7 + $0x1f8] sm:$0xff]
        %v2072 = vld [vmem:[%s4] sm:$0x3]
        %v2074 = vlaneseq
        %v2075 = vshrl.u32 %v2074, 7
        %v2076 = vsub.s32 0, %v2075
        %v2077 = vrot.slane %v2072, %v2076
        %v2078 = vlaneseq
        %v2079 = vshrl.u32 %v2078, 7
        %v2080 = vsub.s32 1, %v2079
        %v2081 = vrot.slane %v2072, %v2080
        %v2148 = vunpack.c.l.b16 %v2008
        %v2149 = vunpack.c.h.b16 %v2008
        %v2150 = vunpack.c.l.b16 %v2009
        %v2151 = vunpack.c.h.b16 %v2009
        %v2152 = vunpack.c.l.b16 %v2010
        %v2153 = vunpack.c.h.b16 %v2010
        %v2154 = vunpack.c.l.b16 %v2011
        %v2155 = vunpack.c.h.b16 %v2011
        %v2156 = vunpack.c.l.b16 %v2012
        %v2157 = vunpack.c.h.b16 %v2012
        %v2158 = vunpack.c.l.b16 %v2013
        %v2159 = vunpack.c.h.b16 %v2013
        %v2160 = vunpack.c.l.b16 %v2014
        %v2161 = vunpack.c.h.b16 %v2014
        %v2162 = vunpack.c.l.b16 %v2015
        %v2163 = vunpack.c.h.b16 %v2015
        %v2164 = vunpack.c.l.b16 %v2016
        %v2165 = vunpack.c.h.b16 %v2016
        %v2166 = vunpack.c.l.b16 %v2017
        %v2167 = vunpack.c.h.b16 %v2017
        %v2168 = vunpack.c.l.b16 %v2018
        %v2169 = vunpack.c.h.b16 %v2018
        %v2170 = vunpack.c.l.b16 %v2019
        %v2171 = vunpack.c.h.b16 %v2019
        %v2172 = vunpack.c.l.b16 %v2020
        %v2173 = vunpack.c.h.b16 %v2020
        %v2174 = vunpack.c.l.b16 %v2021
        %v2175 = vunpack.c.h.b16 %v2021
        %v2176 = vunpack.c.l.b16 %v2022
        %v2177 = vunpack.c.h.b16 %v2022
        %v2178 = vunpack.c.l.b16 %v2023
        %v2179 = vunpack.c.h.b16 %v2023
        %v2180 = vunpack.c.l.b16 %v2024
        %v2181 = vunpack.c.h.b16 %v2024
        %v2182 = vunpack.c.l.b16 %v2025
        %v2183 = vunpack.c.h.b16 %v2025
        %v2184 = vunpack.c.l.b16 %v2026
        %v2185 = vunpack.c.h.b16 %v2026
        %v2186 = vunpack.c.l.b16 %v2027
        %v2187 = vunpack.c.h.b16 %v2027
        %v2188 = vunpack.c.l.b16 %v2028
        %v2189 = vunpack.c.h.b16 %v2028
        %v2190 = vunpack.c.l.b16 %v2029
        %v2191 = vunpack.c.h.b16 %v2029
        %v2192 = vunpack.c.l.b16 %v2030
        %v2193 = vunpack.c.h.b16 %v2030
        %v2194 = vunpack.c.l.b16 %v2031
        %v2195 = vunpack.c.h.b16 %v2031
        %v2196 = vunpack.c.l.b16 %v2032
        %v2197 = vunpack.c.h.b16 %v2032
        %v2198 = vunpack.c.l.b16 %v2033
        %v2199 = vunpack.c.h.b16 %v2033
        %v2200 = vunpack.c.l.b16 %v2034
        %v2201 = vunpack.c.h.b16 %v2034
        %v2202 = vunpack.c.l.b16 %v2035
        %v2203 = vunpack.c.h.b16 %v2035
        %v2204 = vunpack.c.l.b16 %v2036
        %v2205 = vunpack.c.h.b16 %v2036
        %v2206 = vunpack.c.l.b16 %v2037
        %v2207 = vunpack.c.h.b16 %v2037
        %v2208 = vunpack.c.l.b16 %v2038
        %v2209 = vunpack.c.h.b16 %v2038
        %v2210 = vunpack.c.l.b16 %v2039
        %v2211 = vunpack.c.h.b16 %v2039
        %v2212 = vunpack.c.l.b16 %v2040
        %v2213 = vunpack.c.h.b16 %v2040
        %v2214 = vunpack.c.l.b16 %v2041
        %v2215 = vunpack.c.h.b16 %v2041
        %v2216 = vunpack.c.l.b16 %v2042
        %v2217 = vunpack.c.h.b16 %v2042
        %v2218 = vunpack.c.l.b16 %v2043
        %v2219 = vunpack.c.h.b16 %v2043
        %v2220 = vunpack.c.l.b16 %v2044
        %v2221 = vunpack.c.h.b16 %v2044
        %v2222 = vunpack.c.l.b16 %v2045
        %v2223 = vunpack.c.h.b16 %v2045
        %v2224 = vunpack.c.l.b16 %v2046
        %v2225 = vunpack.c.h.b16 %v2046
        %v2226 = vunpack.c.l.b16 %v2047
        %v2227 = vunpack.c.h.b16 %v2047
        %v2228 = vunpack.c.l.b16 %v2048
        %v2229 = vunpack.c.h.b16 %v2048
        %v2230 = vunpack.c.l.b16 %v2049
        %v2231 = vunpack.c.h.b16 %v2049
        %v2232 = vunpack.c.l.b16 %v2050
        %v2233 = vunpack.c.h.b16 %v2050
        %v2234 = vunpack.c.l.b16 %v2051
        %v2235 = vunpack.c.h.b16 %v2051
        %v2236 = vunpack.c.l.b16 %v2052
        %v2237 = vunpack.c.h.b16 %v2052
        %v2238 = vunpack.c.l.b16 %v2053
        %v2239 = vunpack.c.h.b16 %v2053
        %v2240 = vunpack.c.l.b16 %v2054
        %v2241 = vunpack.c.h.b16 %v2054
        %v2242 = vunpack.c.l.b16 %v2055
        %v2243 = vunpack.c.h.b16 %v2055
        %v2244 = vunpack.c.l.b16 %v2056
        %v2245 = vunpack.c.h.b16 %v2056
        %v2246 = vunpack.c.l.b16 %v2057
        %v2247 = vunpack.c.h.b16 %v2057
        %v2248 = vunpack.c.l.b16 %v2058
        %v2249 = vunpack.c.h.b16 %v2058
        %v2250 = vunpack.c.l.b16 %v2059
        %v2251 = vunpack.c.h.b16 %v2059
        %v2252 = vunpack.c.l.b16 %v2060
        %v2253 = vunpack.c.h.b16 %v2060
        %v2254 = vunpack.c.l.b16 %v2061
        %v2255 = vunpack.c.h.b16 %v2061
        %v2256 = vunpack.c.l.b16 %v2062
        %v2257 = vunpack.c.h.b16 %v2062
        %v2258 = vunpack.c.l.b16 %v2063
        %v2259 = vunpack.c.h.b16 %v2063
        %v2260 = vunpack.c.l.b16 %v2064
        %v2261 = vunpack.c.h.b16 %v2064
        %v2262 = vunpack.c.l.b16 %v2065
        %v2263 = vunpack.c.h.b16 %v2065
        %v2264 = vunpack.c.l.b16 %v2066
        %v2265 = vunpack.c.h.b16 %v2066
        %v2266 = vunpack.c.l.b16 %v2067
        %v2267 = vunpack.c.h.b16 %v2067
        %v2268 = vunpack.c.l.b16 %v2068
        %v2269 = vunpack.c.h.b16 %v2068
        %v2270 = vunpack.c.l.b16 %v2069
        %v2271 = vunpack.c.h.b16 %v2069
        %v2272 = vunpack.c.l.b16 %v2070
        %v2273 = vunpack.c.h.b16 %v2070
        %v2274 = vunpack.c.l.b16 %v2071
        %v2275 = vunpack.c.h.b16 %v2071
        %v2276 = vpack.c.b16 %v2150, %v2148
        %v2277 = vpack.c.b16 %v2151, %v2149
        %v2278 = vpack.c.b16 %v2154, %v2152
        %v2279 = vpack.c.b16 %v2155, %v2153
        %v2280 = vpack.c.b16 %v2158, %v2156
        %v2281 = vpack.c.b16 %v2159, %v2157
        %v2282 = vpack.c.b16 %v2162, %v2160
        %v2283 = vpack.c.b16 %v2163, %v2161
        %v2284 = vpack.c.b16 %v2166, %v2164
        %v2285 = vpack.c.b16 %v2167, %v2165
        %v2286 = vpack.c.b16 %v2170, %v2168
        %v2287 = vpack.c.b16 %v2171, %v2169
        %v2288 = vpack.c.b16 %v2174, %v2172
        %v2289 = vpack.c.b16 %v2175, %v2173
        %v2290 = vpack.c.b16 %v2178, %v2176
        %v2291 = vpack.c.b16 %v2179, %v2177
        %v2292 = vpack.c.b16 %v2182, %v2180
        %v2293 = vpack.c.b16 %v2183, %v2181
        %v2294 = vpack.c.b16 %v2186, %v2184
        %v2295 = vpack.c.b16 %v2187, %v2185
        %v2296 = vpack.c.b16 %v2190, %v2188
        %v2297 = vpack.c.b16 %v2191, %v2189
        %v2298 = vpack.c.b16 %v2194, %v2192
        %v2299 = vpack.c.b16 %v2195, %v2193
        %v2300 = vpack.c.b16 %v2198, %v2196
        %v2301 = vpack.c.b16 %v2199, %v2197
        %v2302 = vpack.c.b16 %v2202, %v2200
        %v2303 = vpack.c.b16 %v2203, %v2201
        %v2304 = vpack.c.b16 %v2206, %v2204
        %v2305 = vpack.c.b16 %v2207, %v2205
        %v2306 = vpack.c.b16 %v2210, %v2208
        %v2307 = vpack.c.b16 %v2211, %v2209
        %v2308 = vpack.c.b16 %v2214, %v2212
        %v2309 = vpack.c.b16 %v2215, %v2213
        %v2310 = vpack.c.b16 %v2218, %v2216
        %v2311 = vpack.c.b16 %v2219, %v2217
        %v2312 = vpack.c.b16 %v2222, %v2220
        %v2313 = vpack.c.b16 %v2223, %v2221
        %v2314 = vpack.c.b16 %v2226, %v2224
        %v2315 = vpack.c.b16 %v2227, %v2225
        %v2316 = vpack.c.b16 %v2230, %v2228
        %v2317 = vpack.c.b16 %v2231, %v2229
        %v2318 = vpack.c.b16 %v2234, %v2232
        %v2319 = vpack.c.b16 %v2235, %v2233
        %v2320 = vpack.c.b16 %v2238, %v2236
        %v2321 = vpack.c.b16 %v2239, %v2237
        %v2322 = vpack.c.b16 %v2242, %v2240
        %v2323 = vpack.c.b16 %v2243, %v2241
        %v2324 = vpack.c.b16 %v2246, %v2244
        %v2325 = vpack.c.b16 %v2247, %v2245
        %v2326 = vpack.c.b16 %v2250, %v2248
        %v2327 = vpack.c.b16 %v2251, %v2249
        %v2328 = vpack.c.b16 %v2254, %v2252
        %v2329 = vpack.c.b16 %v2255, %v2253
        %v2330 = vpack.c.b16 %v2258, %v2256
        %v2331 = vpack.c.b16 %v2259, %v2257
        %v2332 = vpack.c.b16 %v2262, %v2260
        %v2333 = vpack.c.b16 %v2263, %v2261
        %v2334 = vpack.c.b16 %v2266, %v2264
        %v2335 = vpack.c.b16 %v2267, %v2265
        %v2336 = vpack.c.b16 %v2270, %v2268
        %v2337 = vpack.c.b16 %v2271, %v2269
        %v2338 = vpack.c.b16 %v2274, %v2272
        %v2339 = vpack.c.b16 %v2275, %v2273
        %2404 = vmatprep.subr.bf16.mxu0 %v2291
        %2405 = vmatpush1.bf16.msra.mxu0 %v2290
        %2406 = vmatprep.subr.bf16.mxu0 %v2289
        %2407 = vmatpush1.bf16.msra.mxu0 %v2288
        %2408 = vmatprep.subr.bf16.mxu0 %v2287
        %2409 = vmatpush1.bf16.msra.mxu0 %v2286
        %2410 = vmatprep.subr.bf16.mxu0 %v2285
        %2411 = vmatpush1.bf16.msra.mxu0 %v2284
        %2412 = vmatprep.subr.bf16.mxu0 %v2283
        %2413 = vmatpush1.bf16.msra.mxu0 %v2282
        %2414 = vmatprep.subr.bf16.mxu0 %v2281
        %2415 = vmatpush1.bf16.msra.mxu0 %v2280
        %2416 = vmatprep.subr.bf16.mxu0 %v2279
        %2417 = vmatpush1.bf16.msra.mxu0 %v2278
        %2418 = vmatprep.subr.bf16.mxu0 %v2277
        %2419 = vmatpush1.bf16.msra.mxu0 %v2276
        %2420 = vmatprep.subr.bf16.mxu0 %v2307
        %2421 = vmatpush2.bf16.msra.mxu0 %v2306
        %2422 = vmatprep.subr.bf16.mxu0 %v2305
        %2423 = vmatpush2.bf16.msra.mxu0 %v2304
        %2424 = vmatprep.subr.bf16.mxu0 %v2303
        %2425 = vmatpush2.bf16.msra.mxu0 %v2302
        %2426 = vmatprep.subr.bf16.mxu0 %v2301
        %2427 = vmatpush2.bf16.msra.mxu0 %v2300
        %2428 = vmatprep.subr.bf16.mxu0 %v2299
        %2429 = vmatpush2.bf16.msra.mxu0 %v2298
        %2430 = vmatprep.subr.bf16.mxu0 %v2297
        %2431 = vmatpush2.bf16.msra.mxu0 %v2296
        %2432 = vmatprep.subr.bf16.mxu0 %v2295
        %2433 = vmatpush2.bf16.msra.mxu0 %v2294
        %2434 = vmatprep.subr.bf16.mxu0 %v2293
        %2435 = vmatpush2.bf16.msra.mxu0 %v2292
        %2436 = vmatprep.mubr.bf16.mxu0 %v2005
        %2437 = vmatmul.mubr.bf16.gmra.mxu0 %v2004
        %v2438 = vpop.f32.mrf.mxu0
        %v2439 = vadd.f32 %v2077, %v2438
        %v2440 = vpop.f32.mrf.mxu0
        %v2441 = vadd.f32 %v2081, %v2440
        %v2442 = vpop.f32.mrf.mxu0
        %v2443 = vpop.f32.mrf.mxu0
        %2444 = vdwg.mxu0
        %2445 = vmatprep.subr.bf16.mxu0 %v2323
        %2446 = vmatpush1.bf16.msra.mxu0 %v2322
        %2447 = vmatprep.subr.bf16.mxu0 %v2321
        %2448 = vmatpush1.bf16.msra.mxu0 %v2320
        %2449 = vmatprep.subr.bf16.mxu0 %v2319
        %2450 = vmatpush1.bf16.msra.mxu0 %v2318
        %2451 = vmatprep.subr.bf16.mxu0 %v2317
        %2452 = vmatpush1.bf16.msra.mxu0 %v2316
        %2453 = vmatprep.subr.bf16.mxu0 %v2315
        %2454 = vmatpush1.bf16.msra.mxu0 %v2314
        %2455 = vmatprep.subr.bf16.mxu0 %v2313
        %2456 = vmatpush1.bf16.msra.mxu0 %v2312
        %2457 = vmatprep.subr.bf16.mxu0 %v2311
        %2458 = vmatpush1.bf16.msra.mxu0 %v2310
        %2459 = vmatprep.subr.bf16.mxu0 %v2309
        %2460 = vmatpush1.bf16.msra.mxu0 %v2308
        %2461 = vmatprep.subr.bf16.mxu0 %v2339
        %2462 = vmatpush2.bf16.msra.mxu0 %v2338
        %2463 = vmatprep.subr.bf16.mxu0 %v2337
        %2464 = vmatpush2.bf16.msra.mxu0 %v2336
        %2465 = vmatprep.subr.bf16.mxu0 %v2335
        %2466 = vmatpush2.bf16.msra.mxu0 %v2334
        %2467 = vmatprep.subr.bf16.mxu0 %v2333
        %2468 = vmatpush2.bf16.msra.mxu0 %v2332
        %2469 = vmatprep.subr.bf16.mxu0 %v2331
        %2470 = vmatpush2.bf16.msra.mxu0 %v2330
        %2471 = vmatprep.subr.bf16.mxu0 %v2329
        %2472 = vmatpush2.bf16.msra.mxu0 %v2328
        %2473 = vmatprep.subr.bf16.mxu0 %v2327
        %2474 = vmatpush2.bf16.msra.mxu0 %v2326
        %2475 = vmatprep.subr.bf16.mxu0 %v2325
        %2476 = vmatpush2.bf16.msra.mxu0 %v2324
        %2477 = vmatprep.mubr.bf16.mxu0 %v2007
        %2478 = vmatmul.mubr.bf16.gmra.mxu0 %v2006
        %v2479 = vpop.f32.mrf.mxu0
        %v2480 = vadd.f32 %v2439, %v2479
        %v2481 = vpop.f32.mrf.mxu0
        %v2482 = vadd.f32 %v2441, %v2481
        %v2483 = vpop.f32.mrf.mxu0
        %v2484 = vpop.f32.mrf.mxu0
        %2485 = vdwg.mxu0
        %v2486 = vmax.f32 %v2480, 0.0
        %v2487 = vmax.f32 %v2482, 0.0
        %v2488 = vpack.c.bf16 %v2486, %v2486
        %v2489 = vpack.c.bf16 %v2487, %v2487
        %v2490 = vld [vmem:[#allocation8] sm:$0xf]
        %v2491 = vld [vmem:[#allocation8 + $0x4] sm:$0xf]
        %v2492 = vld [vmem:[#allocation8 + $0x8] sm:$0xf]
        %v2493 = vld [vmem:[#allocation8 + $0xc] sm:$0xf]
        %v2494 = vld [vmem:[#allocation8 + $0x10] sm:$0xf]
        %v2495 = vld [vmem:[#allocation8 + $0x14] sm:$0xf]
        %v2496 = vld [vmem:[#allocation8 + $0x18] sm:$0xf]
        %v2497 = vld [vmem:[#allocation8 + $0x1c] sm:$0xf]
        %v2498 = vld [vmem:[#allocation8 + $0x20] sm:$0xf]
        %v2499 = vld [vmem:[#allocation8 + $0x24] sm:$0xf]
        %v2500 = vld [vmem:[#allocation8 + $0x28] sm:$0xf]
        %v2501 = vld [vmem:[#allocation8 + $0x2c] sm:$0xf]
        %v2502 = vld [vmem:[#allocation8 + $0x30] sm:$0xf]
        %v2503 = vld [vmem:[#allocation8 + $0x34] sm:$0xf]
        %v2504 = vld [vmem:[#allocation8 + $0x38] sm:$0xf]
        %v2505 = vld [vmem:[#allocation8 + $0x3c] sm:$0xf]
        %v2506 = vld [vmem:[#allocation8 + $0x40] sm:$0xf]
        %v2507 = vld [vmem:[#allocation8 + $0x44] sm:$0xf]
        %v2508 = vld [vmem:[#allocation8 + $0x48] sm:$0xf]
        %v2509 = vld [vmem:[#allocation8 + $0x4c] sm:$0xf]
        %v2510 = vld [vmem:[#allocation8 + $0x50] sm:$0xf]
        %v2511 = vld [vmem:[#allocation8 + $0x54] sm:$0xf]
        %v2512 = vld [vmem:[#allocation8 + $0x58] sm:$0xf]
        %v2513 = vld [vmem:[#allocation8 + $0x5c] sm:$0xf]
        %v2514 = vld [vmem:[#allocation8 + $0x60] sm:$0xf]
        %v2515 = vld [vmem:[#allocation8 + $0x64] sm:$0xf]
        %v2516 = vld [vmem:[#allocation8 + $0x68] sm:$0xf]
        %v2517 = vld [vmem:[#allocation8 + $0x6c] sm:$0xf]
        %v2518 = vld [vmem:[#allocation8 + $0x70] sm:$0xf]
        %v2519 = vld [vmem:[#allocation8 + $0x74] sm:$0xf]
        %v2520 = vld [vmem:[#allocation8 + $0x78] sm:$0xf]
        %v2521 = vld [vmem:[#allocation8 + $0x7c] sm:$0xf]
        %v2522 = vld [vmem:[%s6] sm:$0x1]
        %v2524 = vlaneseq
        %v2525 = vshrl.u32 %v2524, 7
        %v2526 = vsub.s32 0, %v2525
        %v2527 = vrot.slane %v2522, %v2526
        %v2561 = vunpack.c.l.b16 %v2490
        %v2562 = vunpack.c.l.b16 %v2491
        %v2563 = vunpack.c.l.b16 %v2492
        %v2564 = vunpack.c.l.b16 %v2493
        %v2565 = vunpack.c.l.b16 %v2494
        %v2566 = vunpack.c.l.b16 %v2495
        %v2567 = vunpack.c.l.b16 %v2496
        %v2568 = vunpack.c.l.b16 %v2497
        %v2569 = vunpack.c.l.b16 %v2498
        %v2570 = vunpack.c.l.b16 %v2499
        %v2571 = vunpack.c.l.b16 %v2500
        %v2572 = vunpack.c.l.b16 %v2501
        %v2573 = vunpack.c.l.b16 %v2502
        %v2574 = vunpack.c.l.b16 %v2503
        %v2575 = vunpack.c.l.b16 %v2504
        %v2576 = vunpack.c.l.b16 %v2505
        %v2577 = vunpack.c.l.b16 %v2506
        %v2578 = vunpack.c.l.b16 %v2507
        %v2579 = vunpack.c.l.b16 %v2508
        %v2580 = vunpack.c.l.b16 %v2509
        %v2581 = vunpack.c.l.b16 %v2510
        %v2582 = vunpack.c.l.b16 %v2511
        %v2583 = vunpack.c.l.b16 %v2512
        %v2584 = vunpack.c.l.b16 %v2513
        %v2585 = vunpack.c.l.b16 %v2514
        %v2586 = vunpack.c.l.b16 %v2515
        %v2587 = vunpack.c.l.b16 %v2516
        %v2588 = vunpack.c.l.b16 %v2517
        %v2589 = vunpack.c.l.b16 %v2518
        %v2590 = vunpack.c.l.b16 %v2519
        %v2591 = vunpack.c.l.b16 %v2520
        %v2592 = vunpack.c.l.b16 %v2521
        %v2593 = vpack.c.b16 %v2562, %v2561
        %v2594 = vpack.c.b16 %v2564, %v2563
        %v2595 = vpack.c.b16 %v2566, %v2565
        %v2596 = vpack.c.b16 %v2568, %v2567
        %v2597 = vpack.c.b16 %v2570, %v2569
        %v2598 = vpack.c.b16 %v2572, %v2571
        %v2599 = vpack.c.b16 %v2574, %v2573
        %v2600 = vpack.c.b16 %v2576, %v2575
        %v2601 = vpack.c.b16 %v2578, %v2577
        %v2602 = vpack.c.b16 %v2580, %v2579
        %v2603 = vpack.c.b16 %v2582, %v2581
        %v2604 = vpack.c.b16 %v2584, %v2583
        %v2605 = vpack.c.b16 %v2586, %v2585
        %v2606 = vpack.c.b16 %v2588, %v2587
        %v2607 = vpack.c.b16 %v2590, %v2589
        %v2608 = vpack.c.b16 %v2592, %v2591
        %2625 = vmatprep.subr.bf16.mxu0 0
        %2626 = vmatpush1.bf16.msra.mxu0 %v2600
        %2627 = vmatprep.subr.bf16.mxu0 0
        %2628 = vmatpush1.bf16.msra.mxu0 %v2599
        %2629 = vmatprep.subr.bf16.mxu0 0
        %2630 = vmatpush1.bf16.msra.mxu0 %v2598
        %2631 = vmatprep.subr.bf16.mxu0 0
        %2632 = vmatpush1.bf16.msra.mxu0 %v2597
        %2633 = vmatprep.subr.bf16.mxu0 0
        %2634 = vmatpush1.bf16.msra.mxu0 %v2596
        %2635 = vmatprep.subr.bf16.mxu0 0
        %2636 = vmatpush1.bf16.msra.mxu0 %v2595
        %2637 = vmatprep.subr.bf16.mxu0 0
        %2638 = vmatpush1.bf16.msra.mxu0 %v2594
        %2639 = vmatprep.subr.bf16.mxu0 0
        %2640 = vmatpush1.bf16.msra.mxu0 %v2593
        %2641 = vmatprep.subr.bf16.mxu0 0
        %2642 = vmatpush2.bf16.msra.mxu0 %v2608
        %2643 = vmatprep.subr.bf16.mxu0 0
        %2644 = vmatpush2.bf16.msra.mxu0 %v2607
        %2645 = vmatprep.subr.bf16.mxu0 0
        %2646 = vmatpush2.bf16.msra.mxu0 %v2606
        %2647 = vmatprep.subr.bf16.mxu0 0
        %2648 = vmatpush2.bf16.msra.mxu0 %v2605
        %2649 = vmatprep.subr.bf16.mxu0 0
        %2650 = vmatpush2.bf16.msra.mxu0 %v2604
        %2651 = vmatprep.subr.bf16.mxu0 0
        %2652 = vmatpush2.bf16.msra.mxu0 %v2603
        %2653 = vmatprep.subr.bf16.mxu0 0
        %2654 = vmatpush2.bf16.msra.mxu0 %v2602
        %2655 = vmatprep.subr.bf16.mxu0 0
        %2656 = vmatpush2.bf16.msra.mxu0 %v2601
        %2657 = vmatprep.mubr.bf16.mxu0 %v2489
        %2658 = vmatmul.mubr.bf16.gmra.mxu0 %v2488
        %v2659 = vpop.f32.mrf.mxu0
        %v2660 = vadd.f32 %v2527, %v2659
        %v2661 = vpop.f32.mrf.mxu0
        %v2662 = vpop.f32.mrf.mxu0
        %v2663 = vpop.f32.mrf.mxu0
        %2664 = vdwg.mxu0
        %v2665 = vmax.f32 %v2660, 0.0
        %v2666 = vld [vmem:[%s7] sm:$0x1]
        %v2668 = vlaneseq
        %v2669 = vshrl.u32 %v2668, 7
        %v2670 = vsub.s32 0, %v2669
        %v2671 = vrot.slane %v2666, %v2670
        %v2673 = vmul.f32 %v2665, %v2671
        %2674 = vadd.xlane.f32.xlu0 %v2673
        %v2675 = vpop.xlane.xlu0 %2674
        %v2676 = vld [vmem:[#allocation2] sm:$0x1]
        %v2678 = vlaneseq
        %v2679 = vshrl.u32 %v2678, 7
        %v2680 = vsub.s32 0, %v2679
        %v2681 = vrot.slane %v2676, %v2680
        %v2683 = vadd.f32 %v2675, %v2681
        %vm2684 = vcmask 7168
        %2685 = vst.msk [vmem:[%s394] sm:$0xff] %vm2684, %v2683
        %p2686 = scmp.lt.s32.totalorder %s27, 1
        %s2687 = scalar_select %p2686, %s27, 1
        %s2688 = smul.addr %s2687, 8
        %s2689 = scalar_lea.vmem %s9, %s2688
        // Predicated region
        $region73: #{tpu_custom_call.1} parent=55 // pred_check
          %p2690 = pneg %p239
        $region74: #{tpu_custom_call.1} parent=55 // pred_check_branch
          %2692 = sbr.rel (%p2690) target = $region76
        $region75: #{tpu_custom_call.1} parent=55 // pred_region
          _
        $region76: #{tpu_custom_call.1} parent=55 // pred_fallthru
          _
      $region56: #{tpu_custom_call.1} parent=5 // pred_fallthru
        _
      %p2693 = scmp.le.s32.totalorder 2, %s22
      // Predicated region
      $region77: #{tpu_custom_call.1} parent=5 // pred_check
        %p2694 = pneg %p2693
      $region78: #{tpu_custom_call.1} parent=5 // pred_check_branch
        %2696 = sbr.rel (%p2694) target = $region80
      $region79: #{tpu_custom_call.1} parent=5 // pred_region
        %s2697 = ssub.s32 %s22, 2
        // Predicated region
        $region81: #{tpu_custom_call.1} parent=79 // pred_check
          %p2698 = pneg %p245
        $region82: #{tpu_custom_call.1} parent=79 // pred_check_branch
          %2700 = sbr.rel (%p2698) target = $region84
        $region83: #{tpu_custom_call.1} parent=79 // pred_region
          %p2701 = scmp.lt.s32.totalorder %s28, 1
          %s2702 = scalar_select %p2701, %s28, 1
          %s2703 = smul.addr %s2702, 8
          %s2704 = scalar_lea.vmem %s9, %s2703
        $region84: #{tpu_custom_call.1} parent=79 // pred_fallthru
          _
      $region80: #{tpu_custom_call.1} parent=5 // pred_fallthru
        _
    $region6: #{tpu_custom_call.1} parent=1 // loop_footer
      %s26 = sadd.s32 1, %s22
    $region7: #{tpu_custom_call.1} parent=1 // loop_footer_branch
      %21 = sbr.rel target = $region3
    $region8: #{tpu_custom_call.1} parent=1 // loop_exit
      _
    %2705 = vsyncpa [#allocation4], 1
    %s2706 = scalar_lea.sflag [#allocation4], 1
    %2707 = vsyncpa %s2706, 1
    %2708 = vsyncpa [#allocation6], 1
    %2709 = vsyncpa [#allocation9], 1

</llo_original>
